<compile_context>
chip_gen: v7x
topology: tpu7x:2x2x1
jax: 0.10.0
libtpu: 0.0.40
codegen_flags: <defaults>
</compile_context>

<pallas_src>
import functools

import numpy as np
import jax
import jax.numpy as jnp
from jax import lax
from jax.experimental import pallas as pl
from jax.experimental.pallas import tpu as pltpu

BN_EPS = 1e-5
LN_EPS = 1e-5


# ---------------------------------------------------------------------------
# Pallas kernel: whole block forward for NB batch elements per grid step.
# Activations live as (channels, NB*H*W): channels on sublanes, spatial+batch on lanes.
# ---------------------------------------------------------------------------
def lbgc_kernel(x_ref, pslab_ref, mslab_ref, o_ref, *, H, W, NB, C, P, PR):
    HW = H * W
    LW = NB * HW
    f32 = jnp.float32
    bf16 = jnp.bfloat16

    # ---- unpack the packed parameter slab (static ref slices are free) ------
    w1  = pslab_ref[0:P, 0:C]                        # (P, C)   conv1 (bn1 folded)
    w3  = pslab_ref[P:2 * P, 0:P]                    # (P, P)   conv3 (bn3 folded)
    w2s = pslab_ref[2 * P:3 * P, 0:9 * P]            # (P, 9P)  conv2 im2col (bn2 folded)
    wa1 = pslab_ref[3 * P:3 * P + PR, 0:P]           # (PR, P)  channel-add conv #1
    wa2 = pslab_ref[3 * P + PR:4 * P + PR, 0:PR]     # (P, PR)  channel-add conv #2
    vp  = pslab_ref[4 * P + PR:5 * P + PR, 0:5]      # (P, 5)   [b1, b2, b3, wm, ba2]
    vr  = pslab_ref[5 * P + PR:5 * P + 2 * PR, 0:3]  # (PR, 3)  [ba1, ln_gamma, ln_beta]
    b1, b2, b3 = vp[:, 0:1], vp[:, 1:2], vp[:, 2:3]
    wm, ba2 = vp[:, 3:4], vp[:, 4:5]
    ba1, lng, lnb = vr[:, 0:1], vr[:, 1:2], vr[:, 2:3]

    mask = mslab_ref[0:9 * P, :]                     # (9P, LW) per-image edge masks
    segT = mslab_ref[9 * P:9 * P + NB, :]            # (NB, LW) 0/1 image-segment rows

    x = x_ref[...]                                   # (C, LW) lane-dense, f32

    # ---- conv1 (1x1) + bn1 (folded) + relu  (bf16 MXU, f32 accumulate) ------
    h1 = jnp.dot(w1.astype(bf16), x.astype(bf16), preferred_element_type=f32) + b1
    h1 = jnp.maximum(h1, 0.0)                        # (P, LW)

    # ---- conv2 (3x3, pad=1, stride=1) + bn2 + relu: im2col, ONE K=9P matmul -
    # 9 taps = 9 lane-rolls of the flattened spatial axis; a single pre-expanded
    # mask multiply zeroes every out-of-bounds / cross-image tap.
    pieces = []
    for k in range(9):
        dy, dx = k // 3 - 1, k % 3 - 1
        s = dy * W + dx                              # want tap[j] = h1[j + s]
        pieces.append(h1 if s == 0 else pltpu.roll(h1, shift=(-s) % LW, axis=1))
    taps = jnp.concatenate(pieces, axis=0) * mask    # (9P, LW)
    h2 = jnp.dot(w2s.astype(bf16), taps.astype(bf16), preferred_element_type=f32) + b2
    h2 = jnp.maximum(h2, 0.0)                        # (P, LW)

    # ---- conv3 (1x1) + bn3 (folded), no relu --------------------------------
    h3 = jnp.dot(w3.astype(bf16), h2.astype(bf16), preferred_element_type=f32) + b3

    # ---- GC ContextBlock: per-image attention spatial pooling (f32) ---------
    # conv_mask bias is one scalar added to every logit -> cancels in softmax.
    logits = jnp.sum(h3 * wm, axis=0, keepdims=True)          # (1, LW) VPU + XLU
    m = jnp.max(logits, axis=-1, keepdims=True)               # block-global max is a
    e = jnp.exp(logits - m)                                   # valid softmax stabiliser
    # Segmented (per-image) sums via lane-contracting dots against the 0/1 rows.
    denom = lax.dot_general(e, segT, (((1,), (1,)), ((), ())),
                            preferred_element_type=f32)       # (1, NB)
    num = lax.dot_general(h3 * e, segT, (((1,), (1,)), ((), ())),
                          preferred_element_type=f32)         # (P, NB)
    ctx = num * pl.reciprocal(denom, approx=True)             # (P, NB)

    # ---- channel-add branch: 1x1 -> LayerNorm(channels) -> ReLU -> 1x1 ------
    t = jnp.dot(wa1, ctx, preferred_element_type=f32) + ba1   # (PR, NB)
    mu = jnp.mean(t, axis=0, keepdims=True)
    var = jnp.mean((t - mu) ** 2, axis=0, keepdims=True)
    t = (t - mu) * lax.rsqrt(var + LN_EPS) * lng + lnb
    t = jnp.maximum(t, 0.0)
    add = jnp.dot(wa2, t, preferred_element_type=f32) + ba2   # (P, NB)

    # ---- broadcast per-image add over its HW lanes, residual, final relu ----
    add_full = jnp.dot(add, segT, preferred_element_type=f32)  # (P, LW)
    o_ref[...] = jnp.maximum(h3 + add_full + x, 0.0)           # wide, lane-dense store


# ---------------------------------------------------------------------------
# Wrapper: BN folding, slab packing, lane batching, pallas_call
# ---------------------------------------------------------------------------
def _fold_bn(w, b, g, be, m, v):
    s = g / jnp.sqrt(v + BN_EPS)
    return w * s, (b - m) * s + be


def _pick_block_batch(N, HW, max_lanes=1024, min_lanes=512):
    """Images per grid step: aim for >=512 lanes, keep >=2 grid steps when possible."""
    divs = [d for d in range(1, N + 1) if N % d == 0 and d * HW <= max_lanes]
    if not divs:
        return 1
    for d in reversed(divs):                  # prefer >=2 parallel steps (v7x megacore)
        if N // d >= 2 and d * HW >= min_lanes:
            return d
    return divs[-1]


def lbwithgc_forward(x_nchw, p, nb=None):
    x = x_nchw.astype(jnp.float32)
    N, C, H, W = x.shape
    HW = H * W
    P = p['w1'].shape[1]
    PR = p['wa1'].shape[1]
    NB = _pick_block_batch(N, HW) if nb is None else nb
    assert N % NB == 0
    LW = NB * HW

    # ---- fold BN into the convs (eval mode), lay weights out as (out, in) ---
    w1f, b1f = _fold_bn(p['w1'], p['b1'], p['g1'], p['be1'], p['m1'], p['v1'])
    w2f, b2f = _fold_bn(p['w2'], p['b2'], p['g2'], p['be2'], p['m2'], p['v2'])
    w3f, b3f = _fold_bn(p['w3'], p['b3'], p['g3'], p['be3'], p['m3'], p['v3'])

    w1t = jnp.transpose(w1f)                                        # (P, C)
    w3t = jnp.transpose(w3f)                                        # (P, P)
    # im2col weights: w2s[p_out, k*P + p_in] = w2f[ky, kx, p_in, p_out], k = ky*3+kx
    w2s = jnp.transpose(w2f.reshape(9, P, P), (2, 0, 1)).reshape(P, 9 * P)
    wa1t = jnp.transpose(p['wa1'])                                  # (PR, P)
    wa2t = jnp.transpose(p['wa2'])                                  # (P, PR)

    # ---- parameter slab: every small weight/bias at a static offset ---------
    # (In real use this slab would be built once and reused across calls.)
    ncol = max(9 * P, C, PR, 5)
    pslab = jnp.zeros((5 * P + 2 * PR, ncol), jnp.float32)
    pslab = pslab.at[0:P, 0:C].set(w1t)
    pslab = pslab.at[P:2 * P, 0:P].set(w3t)
    pslab = pslab.at[2 * P:3 * P, 0:9 * P].set(w2s)
    pslab = pslab.at[3 * P:3 * P + PR, 0:P].set(wa1t)
    pslab = pslab.at[3 * P + PR:4 * P + PR, 0:PR].set(wa2t)
    vec_p = jnp.stack([b1f, b2f, b3f, p['wm'][:, 0], p['ba2']], axis=1)   # (P, 5)
    vec_r = jnp.stack([p['ba1'], p['lng'], p['lnb']], axis=1)             # (PR, 3)
    pslab = pslab.at[4 * P + PR:5 * P + PR, 0:5].set(vec_p)
    pslab = pslab.at[5 * P + PR:5 * P + 2 * PR, 0:3].set(vec_r)

    # ---- mask + segment slab (constant; lane width = NB*HW) -----------------
    hh = np.repeat(np.arange(H), W)
    ww = np.tile(np.arange(W), H)
    mask_np = np.zeros((9, HW), np.float32)
    for k in range(9):
        dy, dx = k // 3 - 1, k % 3 - 1
        valid = ((hh + dy >= 0) & (hh + dy < H) & (ww + dx >= 0) & (ww + dx < W))
        mask_np[k] = valid.astype(np.float32)
    mask_full = np.repeat(np.tile(mask_np, (1, NB)), P, axis=0)     # (9P, LW), per image
    seg_np = np.zeros((NB, LW), np.float32)
    for b in range(NB):
        seg_np[b, b * HW:(b + 1) * HW] = 1.0                        # (NB, LW)
    mslab = jnp.asarray(np.concatenate([mask_full, seg_np], axis=0))

    # ---- lane-dense channel-major layout: (C, N*HW); the grid slices lanes --
    xr = jnp.transpose(x.reshape(N, C, HW), (1, 0, 2)).reshape(C, N * HW)

    out = pl.pallas_call(
        functools.partial(lbgc_kernel, H=H, W=W, NB=NB, C=C, P=P, PR=PR),
        out_shape=jax.ShapeDtypeStruct((C, N * HW), jnp.float32),
        grid_spec=pltpu.PrefetchScalarGridSpec(
            num_scalar_prefetch=0,
            grid=(N // NB,),
            in_specs=[
                pl.BlockSpec((C, LW), lambda b: (0, b)),
                pl.BlockSpec(pslab.shape, lambda b: (0, 0)),
                pl.BlockSpec(mslab.shape, lambda b: (0, 0)),
            ],
            out_specs=pl.BlockSpec((C, LW), lambda b: (0, b)),
        ),
        compiler_params=pltpu.CompilerParams(
            dimension_semantics=("parallel",)),     # batch blocks are independent
    )(xr, pslab, mslab)

    return jnp.transpose(out.reshape(C, N, HW), (1, 0, 2)).reshape(N, C, H, W)


# ---------------------------------------------------------------------------
# Deterministic synthetic parameters (shapes follow the module __init__)
# ---------------------------------------------------------------------------
def make_params(key, inplanes, planes, ratio=2):
    planes_r = int(planes * ratio)                 # ContextBlock hidden width
    ks = jax.random.split(key, 26)

    def n(k, shape, s=0.1):
        return jax.random.normal(k, shape, jnp.float32) * s

    return dict(
        # conv1 1x1 + bn1
        w1=n(ks[0], (inplanes, planes)), b1=n(ks[1], (planes,)),
        g1=1.0 + n(ks[2], (planes,)), be1=n(ks[3], (planes,)),
        m1=n(ks[4], (planes,)), v1=0.5 + jnp.abs(n(ks[5], (planes,))),
        # conv2 3x3 + bn2   (HWIO)
        w2=n(ks[6], (3, 3, planes, planes)), b2=n(ks[7], (planes,)),
        g2=1.0 + n(ks[8], (planes,)), be2=n(ks[9], (planes,)),
        m2=n(ks[10], (planes,)), v2=0.5 + jnp.abs(n(ks[11], (planes,))),
        # conv3 1x1 + bn3
        w3=n(ks[12], (planes, planes)), b3=n(ks[13], (planes,)),
        g3=1.0 + n(ks[14], (planes,)), be3=n(ks[15], (planes,)),
        m3=n(ks[16], (planes,)), v3=0.5 + jnp.abs(n(ks[17], (planes,))),
        # ContextBlock: conv_mask (P->1), channel_add_conv (P->2P, LN, ReLU, 2P->P)
        wm=n(ks[18], (planes, 1)), bm=n(ks[19], (1,)),
        wa1=n(ks[20], (planes, planes_r)), ba1=n(ks[21], (planes_r,)),
        lng=1.0 + n(ks[22], (planes_r,)), lnb=n(ks[23], (planes_r,)),
        wa2=n(ks[24], (planes_r, planes)), ba2=n(ks[25], (planes,)),
    )


# ---------------------------------------------------------------------------
# Pure-JAX reference (unfolded BN, lax.conv, full f32) for correctness check
# ---------------------------------------------------------------------------
def reference(x_nchw, p):
    x = jnp.transpose(x_nchw, (0, 2, 3, 1)).astype(jnp.float32)

    def bn(y, g, be, m, v):
        return (y - m) / jnp.sqrt(v + BN_EPS) * g + be

    h = jnp.einsum('nhwc,cp->nhwp', x, p['w1']) + p['b1']
    h = jax.nn.relu(bn(h, p['g1'], p['be1'], p['m1'], p['v1']))
    h = lax.conv_general_dilated(h, p['w2'], (1, 1), 'SAME',
                                 dimension_numbers=('NHWC', 'HWIO', 'NHWC')) + p['b2']
    h = jax.nn.relu(bn(h, p['g2'], p['be2'], p['m2'], p['v2']))
    h = jnp.einsum('nhwc,cp->nhwp', h, p['w3']) + p['b3']
    h = bn(h, p['g3'], p['be3'], p['m3'], p['v3'])

    N, H, W, C = h.shape
    hf = h.reshape(N, H * W, C)
    logits = jnp.einsum('nsc,ck->nsk', hf, p['wm'])[..., 0] + p['bm'][0]
    att = jax.nn.softmax(logits, axis=-1)
    ctx = jnp.einsum('ns,nsc->nc', att, hf)

    t = ctx @ p['wa1'] + p['ba1']
    mu = t.mean(-1, keepdims=True)
    var = ((t - mu) ** 2).mean(-1, keepdims=True)
    t = (t - mu) / jnp.sqrt(var + LN_EPS) * p['lng'] + p['lnb']
    t = jax.nn.relu(t)
    add = t @ p['wa2'] + p['ba2']

    out = jax.nn.relu(h + add[:, None, None, :] + x)
    return jnp.transpose(out, (0, 3, 1, 2))


if __name__ == "__main__":
    # inplanes == planes so the identity residual is valid (downsample=None, stride=1)
    N, C, H, W = 2, 4, 16, 16
    x = jax.random.normal(jax.random.PRNGKey(0), (N, C, H, W), jnp.float32)
    params = make_params(jax.random.PRNGKey(1), inplanes=C, planes=C, ratio=2)

    out = jax.block_until_ready(lbwithgc_forward(x, params))
    ref = jax.block_until_ready(reference(x, params))

    # Tolerance accounts for bf16 MXU inputs (f32 accumulation) in the conv matmuls
    # and the approx softmax reciprocal, vs. a full-f32 reference.
    np.testing.assert_allclose(np.asarray(out), np.asarray(ref), rtol=2e-2, atol=2e-2)

    print("KERNEL_OK")
</pallas_src>

<mosaic_0001>
module attributes {stable_mosaic.version = 11 : i64} {
  func.func @lbgc_kernel(%arg0: i32, %arg1: memref<4x512xf32, #tpu.memory_space<vmem>>, %arg2: memref<36x36xf32, #tpu.memory_space<vmem>>, %arg3: memref<38x512xf32, #tpu.memory_space<vmem>>, %arg4: memref<4x512xf32, #tpu.memory_space<vmem>>) attributes {dimension_semantics = [#tpu.dimension_semantics<parallel>], iteration_bounds = array<i64: 1>, scalar_prefetch = 0 : i64, scratch_operands = 0 : i64, tpu.core_type = #tpu.core_type<tc>, window_params = [{transform_indices = @transform_0, window_bounds = array<i64: 4, 512>}, {pipeline_mode = #tpu.pipeline_mode<synchronous>, transform_indices = @transform_1, window_bounds = array<i64: 36, 36>}, {pipeline_mode = #tpu.pipeline_mode<synchronous>, transform_indices = @transform_2, window_bounds = array<i64: 38, 512>}, {transform_indices = @transform_3, window_bounds = array<i64: 4, 512>}]} {
    %c0 = arith.constant 0 : index
    %c0_0 = arith.constant 0 : index
    %0 = vector.load %arg2[%c0, %c0_0] : memref<36x36xf32, #tpu.memory_space<vmem>>, vector<4x4xf32>
    %c4 = arith.constant 4 : index
    %c0_1 = arith.constant 0 : index
    %1 = vector.load %arg2[%c4, %c0_1] : memref<36x36xf32, #tpu.memory_space<vmem>>, vector<4x4xf32>
    %c8 = arith.constant 8 : index
    %c0_2 = arith.constant 0 : index
    %2 = vector.load %arg2[%c8, %c0_2] : memref<36x36xf32, #tpu.memory_space<vmem>>, vector<4x36xf32>
    %c12 = arith.constant 12 : index
    %c0_3 = arith.constant 0 : index
    %3 = vector.load %arg2[%c12, %c0_3] : memref<36x36xf32, #tpu.memory_space<vmem>>, vector<8x4xf32>
    %c20 = arith.constant 20 : index
    %c0_4 = arith.constant 0 : index
    %4 = vector.load %arg2[%c20, %c0_4] : memref<36x36xf32, #tpu.memory_space<vmem>>, vector<4x8xf32>
    %c24 = arith.constant 24 : index
    %c0_5 = arith.constant 0 : index
    %5 = vector.load %arg2[%c24, %c0_5] : memref<36x36xf32, #tpu.memory_space<vmem>>, vector<4x5xf32>
    %c28 = arith.constant 28 : index
    %c0_6 = arith.constant 0 : index
    %6 = vector.load %arg2[%c28, %c0_6] : memref<36x36xf32, #tpu.memory_space<vmem>>, vector<8x3xf32>
    %7 = vector.extract_strided_slice %5 {offsets = [0, 0], sizes = [4, 1], strides = [1, 1]} : vector<4x5xf32> to vector<4x1xf32>
    %8 = vector.extract_strided_slice %5 {offsets = [0, 1], sizes = [4, 1], strides = [1, 1]} : vector<4x5xf32> to vector<4x1xf32>
    %9 = vector.extract_strided_slice %5 {offsets = [0, 2], sizes = [4, 1], strides = [1, 1]} : vector<4x5xf32> to vector<4x1xf32>
    %10 = vector.extract_strided_slice %5 {offsets = [0, 3], sizes = [4, 1], strides = [1, 1]} : vector<4x5xf32> to vector<4x1xf32>
    %11 = vector.extract_strided_slice %5 {offsets = [0, 4], sizes = [4, 1], strides = [1, 1]} : vector<4x5xf32> to vector<4x1xf32>
    %12 = vector.extract_strided_slice %6 {offsets = [0, 0], sizes = [8, 1], strides = [1, 1]} : vector<8x3xf32> to vector<8x1xf32>
    %13 = vector.extract_strided_slice %6 {offsets = [0, 1], sizes = [8, 1], strides = [1, 1]} : vector<8x3xf32> to vector<8x1xf32>
    %14 = vector.extract_strided_slice %6 {offsets = [0, 2], sizes = [8, 1], strides = [1, 1]} : vector<8x3xf32> to vector<8x1xf32>
    %c0_7 = arith.constant 0 : index
    %c0_8 = arith.constant 0 : index
    %15 = vector.load %arg3[%c0_7, %c0_8] : memref<38x512xf32, #tpu.memory_space<vmem>>, vector<36x512xf32>
    %c36 = arith.constant 36 : index
    %c0_9 = arith.constant 0 : index
    %16 = vector.load %arg3[%c36, %c0_9] : memref<38x512xf32, #tpu.memory_space<vmem>>, vector<2x512xf32>
    %c0_10 = arith.constant 0 : index
    %c0_11 = arith.constant 0 : index
    %17 = vector.load %arg1[%c0_10, %c0_11] : memref<4x512xf32, #tpu.memory_space<vmem>>, vector<4x512xf32>
    %18 = arith.truncf %0 : vector<4x4xf32> to vector<4x4xbf16>
    %19 = arith.truncf %17 : vector<4x512xf32> to vector<4x512xbf16>
    %cst = arith.constant dense<0.000000e+00> : vector<4x512xf32>
    %20 = tpu.matmul %18, %19, %cst {dimension_numbers = #tpu.dot_dimension_numbers<[1], [0], [0], [1], [0, 0, 1, 1], [], []>} : vector<4x4xbf16>, vector<4x512xbf16>, vector<4x512xf32> -> vector<4x512xf32>
    %21 = vector.broadcast %7 : vector<4x1xf32> to vector<4x512xf32>
    %22 = arith.addf %20, %21 : vector<4x512xf32>
    %cst_12 = arith.constant 0.000000e+00 : f32
    %23 = vector.broadcast %cst_12 : f32 to vector<4x512xf32>
    %24 = arith.maximumf %22, %23 : vector<4x512xf32>
    %c17_i32 = arith.constant 17 : i32
    %25 = tpu.dynamic_rotate %24 by %c17_i32 dim 1 : vector<4x512xf32>, i32 -> vector<4x512xf32>
    %c16_i32 = arith.constant 16 : i32
    %26 = tpu.dynamic_rotate %24 by %c16_i32 dim 1 : vector<4x512xf32>, i32 -> vector<4x512xf32>
    %c15_i32 = arith.constant 15 : i32
    %27 = tpu.dynamic_rotate %24 by %c15_i32 dim 1 : vector<4x512xf32>, i32 -> vector<4x512xf32>
    %c1_i32 = arith.constant 1 : i32
    %28 = tpu.dynamic_rotate %24 by %c1_i32 dim 1 : vector<4x512xf32>, i32 -> vector<4x512xf32>
    %c511_i32 = arith.constant 511 : i32
    %29 = tpu.dynamic_rotate %24 by %c511_i32 dim 1 : vector<4x512xf32>, i32 -> vector<4x512xf32>
    %c497_i32 = arith.constant 497 : i32
    %30 = tpu.dynamic_rotate %24 by %c497_i32 dim 1 : vector<4x512xf32>, i32 -> vector<4x512xf32>
    %c496_i32 = arith.constant 496 : i32
    %31 = tpu.dynamic_rotate %24 by %c496_i32 dim 1 : vector<4x512xf32>, i32 -> vector<4x512xf32>
    %c495_i32 = arith.constant 495 : i32
    %32 = tpu.dynamic_rotate %24 by %c495_i32 dim 1 : vector<4x512xf32>, i32 -> vector<4x512xf32>
    %33 = tpu.concatenate %25, %26, %27, %28, %24, %29, %30, %31, %32 in 0 : vector<4x512xf32>, vector<4x512xf32>, vector<4x512xf32>, vector<4x512xf32>, vector<4x512xf32>, vector<4x512xf32>, vector<4x512xf32>, vector<4x512xf32>, vector<4x512xf32> -> vector<36x512xf32>
    %34 = arith.mulf %33, %15 : vector<36x512xf32>
    %35 = arith.truncf %2 : vector<4x36xf32> to vector<4x36xbf16>
    %36 = arith.truncf %34 : vector<36x512xf32> to vector<36x512xbf16>
    %cst_13 = arith.constant dense<0.000000e+00> : vector<4x512xf32>
    %37 = tpu.matmul %35, %36, %cst_13 {dimension_numbers = #tpu.dot_dimension_numbers<[1], [0], [0], [1], [0, 0, 1, 1], [], []>} : vector<4x36xbf16>, vector<36x512xbf16>, vector<4x512xf32> -> vector<4x512xf32>
    %38 = vector.broadcast %8 : vector<4x1xf32> to vector<4x512xf32>
    %39 = arith.addf %37, %38 : vector<4x512xf32>
    %cst_14 = arith.constant 0.000000e+00 : f32
    %40 = vector.broadcast %cst_14 : f32 to vector<4x512xf32>
    %41 = arith.maximumf %39, %40 : vector<4x512xf32>
    %42 = arith.truncf %1 : vector<4x4xf32> to vector<4x4xbf16>
    %43 = arith.truncf %41 : vector<4x512xf32> to vector<4x512xbf16>
    %cst_15 = arith.constant dense<0.000000e+00> : vector<4x512xf32>
    %44 = tpu.matmul %42, %43, %cst_15 {dimension_numbers = #tpu.dot_dimension_numbers<[1], [0], [0], [1], [0, 0, 1, 1], [], []>} : vector<4x4xbf16>, vector<4x512xbf16>, vector<4x512xf32> -> vector<4x512xf32>
    %45 = vector.broadcast %9 : vector<4x1xf32> to vector<4x512xf32>
    %46 = arith.addf %44, %45 : vector<4x512xf32>
    %47 = vector.broadcast %10 : vector<4x1xf32> to vector<4x512xf32>
    %48 = arith.mulf %46, %47 : vector<4x512xf32>
    %cst_16 = arith.constant dense<0.000000e+00> : vector<512xf32>
    %49 = vector.multi_reduction <add>, %48, %cst_16 [0] : vector<4x512xf32> to vector<512xf32>
    %50 = vector.shape_cast %49 : vector<512xf32> to vector<1x512xf32>
    %cst_17 = arith.constant dense<0xFF800000> : vector<1xf32>
    %51 = vector.multi_reduction <maximumf>, %50, %cst_17 [1] : vector<1x512xf32> to vector<1xf32>
    %52 = vector.shape_cast %51 : vector<1xf32> to vector<1x1xf32>
    %53 = vector.broadcast %52 : vector<1x1xf32> to vector<1x512xf32>
    %54 = arith.subf %50, %53 : vector<1x512xf32>
    %55 = math.exp %54 : vector<1x512xf32>
    %cst_18 = arith.constant dense<0.000000e+00> : vector<1x2xf32>
    %56 = tpu.matmul %55, %16, %cst_18 {dimension_numbers = #tpu.dot_dimension_numbers<[1], [1], [0], [0], [0, 0, 1, 0], [], []>} : vector<1x512xf32>, vector<2x512xf32>, vector<1x2xf32> -> vector<1x2xf32>
    %57 = vector.broadcast %55 : vector<1x512xf32> to vector<4x512xf32>
    %58 = arith.mulf %46, %57 : vector<4x512xf32>
    %cst_19 = arith.constant dense<0.000000e+00> : vector<4x2xf32>
    %59 = tpu.matmul %58, %16, %cst_19 {dimension_numbers = #tpu.dot_dimension_numbers<[1], [1], [0], [0], [0, 0, 1, 0], [], []>} : vector<4x512xf32>, vector<2x512xf32>, vector<4x2xf32> -> vector<4x2xf32>
    %60 = tpu.reciprocal %56 {approx = true} : vector<1x2xf32> -> vector<1x2xf32>
    %61 = vector.broadcast %60 : vector<1x2xf32> to vector<4x2xf32>
    %62 = arith.mulf %59, %61 : vector<4x2xf32>
    %cst_20 = arith.constant dense<0.000000e+00> : vector<8x2xf32>
    %63 = tpu.matmul %3, %62, %cst_20 {dimension_numbers = #tpu.dot_dimension_numbers<[1], [0], [0], [1], [0, 0, 1, 1], [], []>} : vector<8x4xf32>, vector<4x2xf32>, vector<8x2xf32> -> vector<8x2xf32>
    %64 = vector.broadcast %12 : vector<8x1xf32> to vector<8x2xf32>
    %65 = arith.addf %63, %64 : vector<8x2xf32>
    %cst_21 = arith.constant dense<0.000000e+00> : vector<2xf32>
    %66 = vector.multi_reduction <add>, %65, %cst_21 [0] : vector<8x2xf32> to vector<2xf32>
    %67 = vector.shape_cast %66 : vector<2xf32> to vector<1x2xf32>
    %cst_22 = arith.constant 8.000000e+00 : f32
    %68 = vector.broadcast %cst_22 : f32 to vector<1x2xf32>
    %69 = arith.divf %67, %68 : vector<1x2xf32>
    %70 = vector.broadcast %69 : vector<1x2xf32> to vector<8x2xf32>
    %71 = arith.subf %65, %70 : vector<8x2xf32>
    %72 = arith.mulf %71, %71 : vector<8x2xf32>
    %cst_23 = arith.constant dense<0.000000e+00> : vector<2xf32>
    %73 = vector.multi_reduction <add>, %72, %cst_23 [0] : vector<8x2xf32> to vector<2xf32>
    %74 = vector.shape_cast %73 : vector<2xf32> to vector<1x2xf32>
    %cst_24 = arith.constant 8.000000e+00 : f32
    %75 = vector.broadcast %cst_24 : f32 to vector<1x2xf32>
    %76 = arith.divf %74, %75 : vector<1x2xf32>
    %77 = vector.broadcast %69 : vector<1x2xf32> to vector<8x2xf32>
    %78 = arith.subf %65, %77 : vector<8x2xf32>
    %cst_25 = arith.constant 9.99999974E-6 : f32
    %79 = vector.broadcast %cst_25 : f32 to vector<1x2xf32>
    %80 = arith.addf %76, %79 : vector<1x2xf32>
    %81 = math.rsqrt %80 : vector<1x2xf32>
    %82 = vector.broadcast %81 : vector<1x2xf32> to vector<8x2xf32>
    %83 = arith.mulf %78, %82 : vector<8x2xf32>
    %84 = vector.broadcast %13 : vector<8x1xf32> to vector<8x2xf32>
    %85 = arith.mulf %83, %84 : vector<8x2xf32>
    %86 = vector.broadcast %14 : vector<8x1xf32> to vector<8x2xf32>
    %87 = arith.addf %85, %86 : vector<8x2xf32>
    %cst_26 = arith.constant 0.000000e+00 : f32
    %88 = vector.broadcast %cst_26 : f32 to vector<8x2xf32>
    %89 = arith.maximumf %87, %88 : vector<8x2xf32>
    %cst_27 = arith.constant dense<0.000000e+00> : vector<4x2xf32>
    %90 = tpu.matmul %4, %89, %cst_27 {dimension_numbers = #tpu.dot_dimension_numbers<[1], [0], [0], [1], [0, 0, 1, 1], [], []>} : vector<4x8xf32>, vector<8x2xf32>, vector<4x2xf32> -> vector<4x2xf32>
    %91 = vector.broadcast %11 : vector<4x1xf32> to vector<4x2xf32>
    %92 = arith.addf %90, %91 : vector<4x2xf32>
    %cst_28 = arith.constant dense<0.000000e+00> : vector<4x512xf32>
    %93 = tpu.matmul %92, %16, %cst_28 {dimension_numbers = #tpu.dot_dimension_numbers<[1], [0], [0], [1], [0, 0, 1, 1], [], []>} : vector<4x2xf32>, vector<2x512xf32>, vector<4x512xf32> -> vector<4x512xf32>
    %94 = arith.addf %46, %93 : vector<4x512xf32>
    %95 = arith.addf %94, %17 : vector<4x512xf32>
    %cst_29 = arith.constant 0.000000e+00 : f32
    %96 = vector.broadcast %cst_29 : f32 to vector<4x512xf32>
    %97 = arith.maximumf %95, %96 : vector<4x512xf32>
    %c0_30 = arith.constant 0 : index
    %c0_31 = arith.constant 0 : index
    %98 = vector.load %arg4[%c0_30, %c0_31] : memref<4x512xf32, #tpu.memory_space<vmem>>, vector<4x512xf32>
    tpu.vector_store %arg4[%c0_30, %c0_31], %97 {strides = array<i32>} : memref<4x512xf32, #tpu.memory_space<vmem>>, vector<4x512xf32>,
    return
  }
  func.func @transform_0(%arg0: i32) -> (i32, i32) {
    %c0_i32 = arith.constant 0 : i32
    %c0_i32_0 = arith.constant 0 : i32
    return %c0_i32, %arg0 : i32, i32
  }
  func.func @transform_1(%arg0: i32) -> (i32, i32) {
    %c0_i32 = arith.constant 0 : i32
    %c0_i32_0 = arith.constant 0 : i32
    %c0_i32_1 = arith.constant 0 : i32
    return %c0_i32, %c0_i32_0 : i32, i32
  }
  func.func @transform_2(%arg0: i32) -> (i32, i32) {
    %c0_i32 = arith.constant 0 : i32
    %c0_i32_0 = arith.constant 0 : i32
    %c0_i32_1 = arith.constant 0 : i32
    return %c0_i32, %c0_i32_0 : i32, i32
  }
  func.func @transform_3(%arg0: i32) -> (i32, i32) {
    %c0_i32 = arith.constant 0 : i32
    %c0_i32_0 = arith.constant 0 : i32
    return %c0_i32, %arg0 : i32, i32
  }
}

</mosaic_0001>

<llo_original>
// kernel: tpu_custom_call.1
$region0: #{tpu_custom_call.1}
  #allocation0 [shape = 'u32[]', space=smem, size = 0x4, offset = 0x4, fixed_abs, tag = 'smem constant byte address 0x4 - core index']
  #allocation1 [shape = 'u32[144,128]{1,0:T(1,128)}', space=vmem, size = 0x12000, scoped, tag = 'internal scratch']
  %s0 = inlined_call_operand.hbm [shape: f32[4,512], index: 0, kind: input, shape index: {}]
  %s1 = inlined_call_operand.hbm [shape: f32[36,36], index: 1, kind: input, shape index: {}]
  %s2 = inlined_call_operand.hbm [shape: f32[38,512], index: 2, kind: input, shape index: {}]
  %s3 = inlined_call_operand.hbm [shape: f32[4,512], index: 3, kind: output, shape index: {}]
  %s4 = sld [smem:[#allocation0]]
  $region34: #{tpu_custom_call.1} parent=0
    _
  %s6 = ssub.s32 1, %s4
  %s7 = scalar_select 0, %s6, %s4
  $region1: #{tpu_custom_call.1} parent=0
    #allocation2 [shape = 'u8[8192]{0}', space=vmem, size = 0x2000, scoped, tag = 'input window, operand 0, single buffered']
    #allocation3 [shape = 's32[1]{0}', space=sflag, size = 0x4, scoped, tag = 'scoped memory for tpu_custom_call.1']
    #allocation4 [shape = 's32[1]{0}', space=sflag, size = 0x4, scoped, tag = 'scoped memory for tpu_custom_call.1']
    #allocation5 [shape = 'u8[20480]{0}', space=vmem, size = 0x5000, scoped, tag = 'input window, operand 1, single buffered']
    #allocation6 [shape = 's32[1]{0}', space=sflag, size = 0x4, scoped, tag = 'scoped memory for tpu_custom_call.1']
    #allocation7 [shape = 'u8[81920]{0}', space=vmem, size = 0x14000, scoped, tag = 'input window, operand 2, single buffered']
    #allocation8 [shape = 'u8[8192]{0}', space=vmem, size = 0x2000, scoped, tag = 'output window, operand 0, single buffered']
    %8 = vsyncpa [#allocation3], 0
    %9 = vsyncpa [#allocation6], 0
    %10 = vsyncpa [#allocation4], 0
    // Predicated region
    $region2: #{tpu_custom_call.1} parent=1 // pred_check
      _
    $region3: #{tpu_custom_call.1} parent=1 // pred_check_branch
      %12 = sbr.rel (0) target = $region5
    $region4: #{tpu_custom_call.1} parent=1 // pred_region
      %s14 = ssub.s32 256, 256
      %15 = vsyncadd [#allocation3], %s14
      %s17 = sshll.u32 [#allocation2], 4
      %s18 = int_to_ptr.vmem [resolvable:$true] %s17
      %20 = dma.hbm_to_vmem [thread:$0]  %s0, 256, %s18, [#allocation3]
    $region5: #{tpu_custom_call.1} parent=1 // pred_fallthru
      _
    // Predicated region
    $region6: #{tpu_custom_call.1} parent=1 // pred_check
      _
    $region7: #{tpu_custom_call.1} parent=1 // pred_check_branch
      %22 = sbr.rel (0) target = $region9
    $region8: #{tpu_custom_call.1} parent=1 // pred_region
      %s24 = ssub.s32 640, 640
      %25 = vsyncadd [#allocation6], %s24
      %s26 = sshll.u32 [#allocation5], 4
      %s27 = int_to_ptr.vmem [resolvable:$true] %s26
      %32 = dma.hbm_to_vmem [thread:$0]  %s1, 640, %s27, [#allocation6], 128, 128, 8
    $region9: #{tpu_custom_call.1} parent=1 // pred_fallthru
      _
    // Predicated region
    $region10: #{tpu_custom_call.1} parent=1 // pred_check
      _
    $region11: #{tpu_custom_call.1} parent=1 // pred_check_branch
      %34 = sbr.rel (0) target = $region13
    $region12: #{tpu_custom_call.1} parent=1 // pred_region
      %s36 = ssub.s32 2560, 2560
      %37 = vsyncadd [#allocation6], %s36
      %s38 = sshll.u32 [#allocation7], 4
      %s39 = int_to_ptr.vmem [resolvable:$true] %s38
      %44 = dma.hbm_to_vmem [thread:$0]  %s2, 2560, %s39, [#allocation6], 512, 512, 32
    $region13: #{tpu_custom_call.1} parent=1 // pred_fallthru
      _
    // Predicated region
    $region14: #{tpu_custom_call.1} parent=1 // pred_check
      _
    $region15: #{tpu_custom_call.1} parent=1 // pred_check_branch
      %46 = sbr.rel (0) target = $region17
    $region16: #{tpu_custom_call.1} parent=1 // pred_region
      %47 = dma.done [#allocation3], 256
    $region17: #{tpu_custom_call.1} parent=1 // pred_fallthru
      _
    // Predicated region
    $region18: #{tpu_custom_call.1} parent=1 // pred_check
      _
    $region19: #{tpu_custom_call.1} parent=1 // pred_check_branch
      %49 = sbr.rel (0) target = $region21
    $region20: #{tpu_custom_call.1} parent=1 // pred_region
      %50 = dma.done [#allocation6], 640
    $region21: #{tpu_custom_call.1} parent=1 // pred_fallthru
      _
    // Predicated region
    $region22: #{tpu_custom_call.1} parent=1 // pred_check
      _
    $region23: #{tpu_custom_call.1} parent=1 // pred_check_branch
      %52 = sbr.rel (0) target = $region25
    $region24: #{tpu_custom_call.1} parent=1 // pred_region
      %53 = dma.done [#allocation6], 2560
    $region25: #{tpu_custom_call.1} parent=1 // pred_fallthru
      _
    %v55 = vld [vmem:[#allocation5] sm:$0xf]
    %v56 = vld [vmem:[#allocation5 + $0x4] sm:$0xf]
    %v57 = vld [vmem:[#allocation5 + $0x8] sm:$0xf]
    %v58 = vld [vmem:[#allocation5 + $0xc] sm:$0xff]
    %v59 = vld [vmem:[#allocation5 + $0x14] sm:$0xf]
    %v60 = vld [vmem:[#allocation5 + $0x18] sm:$0xf]
    %v61 = vld [vmem:[#allocation5 + $0x1c] sm:$0xff]
    %v62 = vld [vmem:[#allocation7] sm:$0xff]
    %v63 = vld [vmem:[#allocation7 + $0x8] sm:$0xff]
    %v64 = vld [vmem:[#allocation7 + $0x10] sm:$0xff]
    %v65 = vld [vmem:[#allocation7 + $0x18] sm:$0xff]
    %v66 = vld [vmem:[#allocation7 + $0x20] sm:$0xff]
    %v67 = vld [vmem:[#allocation7 + $0x28] sm:$0xff]
    %v68 = vld [vmem:[#allocation7 + $0x30] sm:$0xff]
    %v69 = vld [vmem:[#allocation7 + $0x38] sm:$0xff]
    %v70 = vld [vmem:[#allocation7 + $0x40] sm:$0xff]
    %v71 = vld [vmem:[#allocation7 + $0x48] sm:$0xff]
    %v72 = vld [vmem:[#allocation7 + $0x50] sm:$0xff]
    %v73 = vld [vmem:[#allocation7 + $0x58] sm:$0xff]
    %v74 = vld [vmem:[#allocation7 + $0x60] sm:$0xff]
    %v75 = vld [vmem:[#allocation7 + $0x68] sm:$0xff]
    %v76 = vld [vmem:[#allocation7 + $0x70] sm:$0xff]
    %v77 = vld [vmem:[#allocation7 + $0x78] sm:$0xff]
    %v78 = vld [vmem:[#allocation7 + $0x80] sm:$0xf]
    %v79 = vld [vmem:[#allocation7 + $0x88] sm:$0xf]
    %v80 = vld [vmem:[#allocation7 + $0x90] sm:$0xf]
    %v81 = vld [vmem:[#allocation7 + $0x98] sm:$0xf]
    %v82 = vld [vmem:[#allocation7 + $0x80] sm:$0x30]
    %v83 = vld [vmem:[#allocation7 + $0x88] sm:$0x30]
    %v84 = vld [vmem:[#allocation7 + $0x90] sm:$0x30]
    %v85 = vld [vmem:[#allocation7 + $0x98] sm:$0x30]
    %v86 = vld [vmem:[#allocation2] sm:$0xff]
    %v87 = vld [vmem:[#allocation2 + $0x8] sm:$0xff]
    %v88 = vpack.c.bf16 %v55, %v55
    %v91 = vcombine.high %v86, %v86
    %v92 = vcombine.high %v87, %v87
    %v95 = vpack.c.bf16 %v86, %v86
    %v96 = vpack.c.bf16 %v91, %v91
    %v97 = vpack.c.bf16 %v87, %v87
    %v98 = vpack.c.bf16 %v92, %v92
    %100 = vset.pattern.permute.xlu0 0
    %101 = vperm.xlu0 %100, %v60
    %v102 = vpop.permute.xlu0 %101
    %vm104 = vcmask 31744
    %v106 = vsel %vm104, %v88, 0
    %vm108 = vcmask 1041408
    %v110 = vsel %vm108, %v95, 0
    %v113 = vsel %vm108, %v96, 0
    %v116 = vsel %vm108, %v97, 0
    %v119 = vsel %vm108, %v98, 0
    %121 = vmatprep.subr.bf16.mxu0 %v113
    %122 = vmatpush1.bf16.msra.mxu0 %v110
    %123 = vmatprep.subr.bf16.mxu0 0
    %124 = vmatpush1.bf16.msra.mxu0 0
    %125 = vmatprep.subr.bf16.mxu0 0
    %126 = vmatpush1.bf16.msra.mxu0 0
    %127 = vmatprep.subr.bf16.mxu0 0
    %128 = vmatpush1.bf16.msra.mxu0 0
    %129 = vmatprep.subr.bf16.mxu0 0
    %130 = vmatpush1.bf16.msra.mxu0 0
    %131 = vmatprep.subr.bf16.mxu0 0
    %132 = vmatpush1.bf16.msra.mxu0 0
    %133 = vmatprep.subr.bf16.mxu0 0
    %134 = vmatpush1.bf16.msra.mxu0 0
    %135 = vmatprep.subr.bf16.mxu0 0
    %136 = vmatpush1.bf16.msra.mxu0 0
    %137 = vmatprep.subr.bf16.mxu0 0
    %138 = vmatpush1.bf16.msra.mxu0 0
    %139 = vmatprep.subr.bf16.mxu0 0
    %140 = vmatpush1.bf16.msra.mxu0 0
    %141 = vmatprep.subr.bf16.mxu0 0
    %142 = vmatpush1.bf16.msra.mxu0 0
    %143 = vmatprep.subr.bf16.mxu0 0
    %144 = vmatpush1.bf16.msra.mxu0 0
    %145 = vmatprep.subr.bf16.mxu0 0
    %146 = vmatpush1.bf16.msra.mxu0 0
    %147 = vmatprep.subr.bf16.mxu0 0
    %148 = vmatpush1.bf16.msra.mxu0 0
    %149 = vmatprep.subr.bf16.mxu0 0
    %150 = vmatpush1.bf16.msra.mxu0 0
    %151 = vmatprep.subr.bf16.mxu0 0
    %152 = vmatpush1.bf16.msra.mxu0 0
    %153 = vmatprep.mubr.bf16.mxu0 0
    %154 = vmatmul.mubr.bf16.gmra.mrb[0].mxu0 %v106
    %v155 = vpop.f32.mrb[0].mxu0
    %v156 = vadd.f32 %v102, %v155
    %v157 = vpop.f32.mrb[0].mxu0
    %v158 = vadd.f32 %v102, %v157
    %v159 = vpop.f32.mrb[0].mxu0
    %v160 = vpop.f32.mrb[0].mxu0
    %161 = vdwg.mxu0
    %162 = vmatprep.subr.bf16.mxu0 %v119
    %163 = vmatpush1.bf16.msra.mxu0 %v116
    %164 = vmatprep.subr.bf16.mxu0 0
    %165 = vmatpush1.bf16.msra.mxu0 0
    %166 = vmatprep.subr.bf16.mxu0 0
    %167 = vmatpush1.bf16.msra.mxu0 0
    %168 = vmatprep.subr.bf16.mxu0 0
    %169 = vmatpush1.bf16.msra.mxu0 0
    %170 = vmatprep.subr.bf16.mxu0 0
    %171 = vmatpush1.bf16.msra.mxu0 0
    %172 = vmatprep.subr.bf16.mxu0 0
    %173 = vmatpush1.bf16.msra.mxu0 0
    %174 = vmatprep.subr.bf16.mxu0 0
    %175 = vmatpush1.bf16.msra.mxu0 0
    %176 = vmatprep.subr.bf16.mxu0 0
    %177 = vmatpush1.bf16.msra.mxu0 0
    %178 = vmatprep.subr.bf16.mxu0 0
    %179 = vmatpush1.bf16.msra.mxu0 0
    %180 = vmatprep.subr.bf16.mxu0 0
    %181 = vmatpush1.bf16.msra.mxu0 0
    %182 = vmatprep.subr.bf16.mxu0 0
    %183 = vmatpush1.bf16.msra.mxu0 0
    %184 = vmatprep.subr.bf16.mxu0 0
    %185 = vmatpush1.bf16.msra.mxu0 0
    %186 = vmatprep.subr.bf16.mxu0 0
    %187 = vmatpush1.bf16.msra.mxu0 0
    %188 = vmatprep.subr.bf16.mxu0 0
    %189 = vmatpush1.bf16.msra.mxu0 0
    %190 = vmatprep.subr.bf16.mxu0 0
    %191 = vmatpush1.bf16.msra.mxu0 0
    %192 = vmatprep.subr.bf16.mxu0 0
    %193 = vmatpush1.bf16.msra.mxu0 0
    %194 = vmatprep.mubr.bf16.mxu0 0
    %195 = vmatmul.mubr.bf16.gmra.mrb[0].mxu0 %v106
    %v196 = vpop.f32.mrb[0].mxu0
    %v197 = vadd.f32 %v102, %v196
    %v198 = vpop.f32.mrb[0].mxu0
    %v199 = vadd.f32 %v102, %v198
    %v200 = vpop.f32.mrb[0].mxu0
    %v201 = vpop.f32.mrb[0].mxu0
    %202 = vdwg.mxu0
    %v203 = vmax.f32 %v156, 0.0
    %v204 = vmax.f32 %v158, 0.0
    %v205 = vmax.f32 %v197, 0.0
    %v206 = vmax.f32 %v199, 0.0
    %207 = vrot.lane.b32.xlu0 %v203, 17
    %v208 = vpop.permute.xlu0 %207
    %209 = vrot.lane.b32.xlu0 %v204, 17
    %v210 = vpop.permute.xlu0 %209
    %211 = vrot.lane.b32.xlu0 %v205, 17
    %v212 = vpop.permute.xlu0 %211
    %213 = vrot.lane.b32.xlu0 %v206, 17
    %v214 = vpop.permute.xlu0 %213
    %v215 = vlaneseq
    %v216 = vand.u32 %v215, 127
    %vm217 = vcmp.lt.s32.totalorder %v216, 17
    %v218 = vsel %vm217, %v212, %v214
    %v219 = vsel %vm217, %v210, %v212
    %v220 = vsel %vm217, %v208, %v210
    %v221 = vsel %vm217, %v214, %v208
    %222 = vrot.lane.b32.xlu0 %v203, 16
    %v223 = vpop.permute.xlu0 %222
    %224 = vrot.lane.b32.xlu0 %v204, 16
    %v225 = vpop.permute.xlu0 %224
    %226 = vrot.lane.b32.xlu0 %v205, 16
    %v227 = vpop.permute.xlu0 %226
    %228 = vrot.lane.b32.xlu0 %v206, 16
    %v229 = vpop.permute.xlu0 %228
    %vm230 = vcmp.lt.s32.totalorder %v216, 16
    %v231 = vsel %vm230, %v227, %v229
    %v232 = vsel %vm230, %v225, %v227
    %v233 = vsel %vm230, %v223, %v225
    %v234 = vsel %vm230, %v229, %v223
    %235 = vrot.lane.b32.xlu0 %v203, 15
    %v236 = vpop.permute.xlu0 %235
    %237 = vrot.lane.b32.xlu0 %v204, 15
    %v238 = vpop.permute.xlu0 %237
    %239 = vrot.lane.b32.xlu0 %v205, 15
    %v240 = vpop.permute.xlu0 %239
    %241 = vrot.lane.b32.xlu0 %v206, 15
    %v242 = vpop.permute.xlu0 %241
    %vm243 = vcmp.lt.s32.totalorder %v216, 15
    %v244 = vsel %vm243, %v240, %v242
    %v245 = vsel %vm243, %v238, %v240
    %v246 = vsel %vm243, %v236, %v238
    %v247 = vsel %vm243, %v242, %v236
    %248 = vrot.lane.b32.xlu0 %v203, 1
    %v249 = vpop.permute.xlu0 %248
    %250 = vrot.lane.b32.xlu0 %v204, 1
    %v251 = vpop.permute.xlu0 %250
    %252 = vrot.lane.b32.xlu0 %v205, 1
    %v253 = vpop.permute.xlu0 %252
    %254 = vrot.lane.b32.xlu0 %v206, 1
    %v255 = vpop.permute.xlu0 %254
    %vm256 = vcmp.lt.s32.totalorder %v216, 1
    %v257 = vsel %vm256, %v253, %v255
    %v258 = vsel %vm256, %v251, %v253
    %v259 = vsel %vm256, %v249, %v251
    %v260 = vsel %vm256, %v255, %v249
    %261 = vrot.lane.b32.xlu0 %v203, 127
    %v262 = vpop.permute.xlu0 %261
    %263 = vrot.lane.b32.xlu0 %v204, 127
    %v264 = vpop.permute.xlu0 %263
    %265 = vrot.lane.b32.xlu0 %v205, 127
    %v266 = vpop.permute.xlu0 %265
    %267 = vrot.lane.b32.xlu0 %v206, 127
    %v268 = vpop.permute.xlu0 %267
    %vm269 = vcmp.lt.s32.totalorder %v216, 127
    %v270 = vsel %vm269, %v266, %v268
    %v271 = vsel %vm269, %v264, %v266
    %v272 = vsel %vm269, %v262, %v264
    %v273 = vsel %vm269, %v268, %v262
    %274 = vrot.lane.b32.xlu0 %v203, 113
    %v275 = vpop.permute.xlu0 %274
    %276 = vrot.lane.b32.xlu0 %v204, 113
    %v277 = vpop.permute.xlu0 %276
    %278 = vrot.lane.b32.xlu0 %v205, 113
    %v279 = vpop.permute.xlu0 %278
    %280 = vrot.lane.b32.xlu0 %v206, 113
    %v281 = vpop.permute.xlu0 %280
    %vm282 = vcmp.lt.s32.totalorder %v216, 113
    %v283 = vsel %vm282, %v279, %v281
    %v284 = vsel %vm282, %v277, %v279
    %v285 = vsel %vm282, %v275, %v277
    %v286 = vsel %vm282, %v281, %v275
    %287 = vrot.lane.b32.xlu0 %v203, 112
    %v288 = vpop.permute.xlu0 %287
    %289 = vrot.lane.b32.xlu0 %v204, 112
    %v290 = vpop.permute.xlu0 %289
    %291 = vrot.lane.b32.xlu0 %v205, 112
    %v292 = vpop.permute.xlu0 %291
    %293 = vrot.lane.b32.xlu0 %v206, 112
    %v294 = vpop.permute.xlu0 %293
    %vm295 = vcmp.lt.s32.totalorder %v216, 112
    %v296 = vsel %vm295, %v292, %v294
    %v297 = vsel %vm295, %v290, %v292
    %v298 = vsel %vm295, %v288, %v290
    %v299 = vsel %vm295, %v294, %v288
    %300 = vrot.lane.b32.xlu0 %v203, 111
    %v301 = vpop.permute.xlu0 %300
    %302 = vrot.lane.b32.xlu0 %v204, 111
    %v303 = vpop.permute.xlu0 %302
    %304 = vrot.lane.b32.xlu0 %v205, 111
    %v305 = vpop.permute.xlu0 %304
    %306 = vrot.lane.b32.xlu0 %v206, 111
    %v307 = vpop.permute.xlu0 %306
    %vm308 = vcmp.lt.s32.totalorder %v216, 111
    %v309 = vsel %vm308, %v305, %v307
    %v310 = vsel %vm308, %v303, %v305
    %v311 = vsel %vm308, %v301, %v303
    %v312 = vsel %vm308, %v307, %v301
    %v317 = vrot.slane %v234, 4
    %v318 = vrot.slane %v233, 4
    %v319 = vrot.slane %v232, 4
    %v320 = vrot.slane %v231, 4
    %v329 = vrot.slane %v260, 4
    %v330 = vrot.slane %v259, 4
    %v331 = vrot.slane %v258, 4
    %v332 = vrot.slane %v257, 4
    %v341 = vrot.slane %v272, 4
    %v342 = vrot.slane %v271, 4
    %v343 = vrot.slane %v270, 4
    %v344 = vrot.slane %v273, 4
    %v353 = vrot.slane %v298, 4
    %v354 = vrot.slane %v297, 4
    %v355 = vrot.slane %v296, 4
    %v356 = vrot.slane %v299, 4
    %vm361 = vcmask 1043456
    %v362 = vsel %vm361, %v221, %v317
    %v363 = vsel %vm361, %v220, %v318
    %v364 = vsel %vm361, %v219, %v319
    %v365 = vsel %vm361, %v218, %v320
    %v366 = vsel %vm361, %v247, %v329
    %v367 = vsel %vm361, %v246, %v330
    %v368 = vsel %vm361, %v245, %v331
    %v369 = vsel %vm361, %v244, %v332
    %v370 = vsel %vm361, %v203, %v341
    %v371 = vsel %vm361, %v204, %v342
    %v372 = vsel %vm361, %v205, %v343
    %v373 = vsel %vm361, %v206, %v344
    %v374 = vsel %vm361, %v285, %v353
    %v375 = vsel %vm361, %v284, %v354
    %v376 = vsel %vm361, %v283, %v355
    %v377 = vsel %vm361, %v286, %v356
    %v378 = vmul.f32 %v362, %v62
    %v379 = vmul.f32 %v363, %v63
    %v380 = vmul.f32 %v364, %v64
    %v381 = vmul.f32 %v365, %v65
    %v382 = vmul.f32 %v366, %v66
    %v383 = vmul.f32 %v367, %v67
    %v384 = vmul.f32 %v368, %v68
    %v385 = vmul.f32 %v369, %v69
    %v386 = vmul.f32 %v370, %v70
    %v387 = vmul.f32 %v371, %v71
    %v388 = vmul.f32 %v372, %v72
    %v389 = vmul.f32 %v373, %v73
    %v390 = vmul.f32 %v374, %v74
    %v391 = vmul.f32 %v375, %v75
    %v392 = vmul.f32 %v376, %v76
    %v393 = vmul.f32 %v377, %v77
    %v394 = vmul.f32 %v311, %v78
    %v395 = vmul.f32 %v310, %v79
    %v396 = vmul.f32 %v309, %v80
    %v397 = vmul.f32 %v312, %v81
    %v398 = vpack.c.bf16 %v57, %v57
    %v399 = vpack.c.bf16 %v382, %v378
    %v400 = vpack.c.bf16 %v383, %v379
    %v401 = vpack.c.bf16 %v384, %v380
    %v402 = vpack.c.bf16 %v385, %v381
    %v403 = vpack.c.bf16 %v390, %v386
    %v404 = vpack.c.bf16 %v391, %v387
    %v405 = vpack.c.bf16 %v392, %v388
    %v406 = vpack.c.bf16 %v393, %v389
    %v407 = vpack.c.bf16 %v394, %v394
    %v408 = vpack.c.bf16 %v395, %v395
    %v409 = vpack.c.bf16 %v396, %v396
    %v410 = vpack.c.bf16 %v397, %v397
    %411 = vset.pattern.permute.xlu0 1
    %412 = vperm.xlu0 %411, %v60
    %v413 = vpop.permute.xlu0 %412
    %vm415 = vcmask 293888
    %v417 = vsel %vm415, %v398, 0
    %v420 = vsel %vm108, %v407, 0
    %v423 = vsel %vm108, %v408, 0
    %v426 = vsel %vm108, %v409, 0
    %v429 = vsel %vm108, %v410, 0
    %431 = vmatprep.subr.bf16.mxu0 %v400
    %432 = vmatpush1.bf16.msra.mxu0 %v399
    %433 = vmatprep.subr.bf16.mxu0 %v404
    %434 = vmatpush1.bf16.msra.mxu0 %v403
    %435 = vmatprep.subr.bf16.mxu0 %v423
    %436 = vmatpush1.bf16.msra.mxu0 %v420
    %437 = vmatprep.subr.bf16.mxu0 0
    %438 = vmatpush1.bf16.msra.mxu0 0
    %439 = vmatprep.subr.bf16.mxu0 0
    %440 = vmatpush1.bf16.msra.mxu0 0
    %441 = vmatprep.subr.bf16.mxu0 0
    %442 = vmatpush1.bf16.msra.mxu0 0
    %443 = vmatprep.subr.bf16.mxu0 0
    %444 = vmatpush1.bf16.msra.mxu0 0
    %445 = vmatprep.subr.bf16.mxu0 0
    %446 = vmatpush1.bf16.msra.mxu0 0
    %447 = vmatprep.subr.bf16.mxu0 0
    %448 = vmatpush1.bf16.msra.mxu0 0
    %449 = vmatprep.subr.bf16.mxu0 0
    %450 = vmatpush1.bf16.msra.mxu0 0
    %451 = vmatprep.subr.bf16.mxu0 0
    %452 = vmatpush1.bf16.msra.mxu0 0
    %453 = vmatprep.subr.bf16.mxu0 0
    %454 = vmatpush1.bf16.msra.mxu0 0
    %455 = vmatprep.subr.bf16.mxu0 0
    %456 = vmatpush1.bf16.msra.mxu0 0
    %457 = vmatprep.subr.bf16.mxu0 0
    %458 = vmatpush1.bf16.msra.mxu0 0
    %459 = vmatprep.subr.bf16.mxu0 0
    %460 = vmatpush1.bf16.msra.mxu0 0
    %461 = vmatprep.subr.bf16.mxu0 0
    %462 = vmatpush1.bf16.msra.mxu0 0
    %463 = vmatprep.mubr.bf16.mxu0 0
    %464 = vmatmul.mubr.bf16.gmra.mrb[0].mxu0 %v417
    %v465 = vpop.f32.mrb[0].mxu0
    %v466 = vadd.f32 %v413, %v465
    %v467 = vpop.f32.mrb[0].mxu0
    %v468 = vadd.f32 %v413, %v467
    %v469 = vpop.f32.mrb[0].mxu0
    %v470 = vpop.f32.mrb[0].mxu0
    %471 = vdwg.mxu0
    %472 = vmatprep.subr.bf16.mxu0 %v402
    %473 = vmatpush1.bf16.msra.mxu0 %v401
    %474 = vmatprep.subr.bf16.mxu0 %v406
    %475 = vmatpush1.bf16.msra.mxu0 %v405
    %476 = vmatprep.subr.bf16.mxu0 %v429
    %477 = vmatpush1.bf16.msra.mxu0 %v426
    %478 = vmatprep.subr.bf16.mxu0 0
    %479 = vmatpush1.bf16.msra.mxu0 0
    %480 = vmatprep.subr.bf16.mxu0 0
    %481 = vmatpush1.bf16.msra.mxu0 0
    %482 = vmatprep.subr.bf16.mxu0 0
    %483 = vmatpush1.bf16.msra.mxu0 0
    %484 = vmatprep.subr.bf16.mxu0 0
    %485 = vmatpush1.bf16.msra.mxu0 0
    %486 = vmatprep.subr.bf16.mxu0 0
    %487 = vmatpush1.bf16.msra.mxu0 0
    %488 = vmatprep.subr.bf16.mxu0 0
    %489 = vmatpush1.bf16.msra.mxu0 0
    %490 = vmatprep.subr.bf16.mxu0 0
    %491 = vmatpush1.bf16.msra.mxu0 0
    %492 = vmatprep.subr.bf16.mxu0 0
    %493 = vmatpush1.bf16.msra.mxu0 0
    %494 = vmatprep.subr.bf16.mxu0 0
    %495 = vmatpush1.bf16.msra.mxu0 0
    %496 = vmatprep.subr.bf16.mxu0 0
    %497 = vmatpush1.bf16.msra.mxu0 0
    %498 = vmatprep.subr.bf16.mxu0 0
    %499 = vmatpush1.bf16.msra.mxu0 0
    %500 = vmatprep.subr.bf16.mxu0 0
    %501 = vmatpush1.bf16.msra.mxu0 0
    %502 = vmatprep.subr.bf16.mxu0 0
    %503 = vmatpush1.bf16.msra.mxu0 0
    %504 = vmatprep.mubr.bf16.mxu0 0
    %505 = vmatmul.mubr.bf16.gmra.mrb[0].mxu0 %v417
    %v506 = vpop.f32.mrb[0].mxu0
    %v507 = vadd.f32 %v413, %v506
    %v508 = vpop.f32.mrb[0].mxu0
    %v509 = vadd.f32 %v413, %v508
    %v510 = vpop.f32.mrb[0].mxu0
    %v511 = vpop.f32.mrb[0].mxu0
    %512 = vdwg.mxu0
    %v513 = vmax.f32 %v466, 0.0
    %v514 = vmax.f32 %v468, 0.0
    %v515 = vmax.f32 %v507, 0.0
    %v516 = vmax.f32 %v509, 0.0
    %v517 = vpack.c.bf16 %v56, %v56
    %v518 = vpack.c.bf16 %v513, %v513
    %v519 = vpack.c.bf16 %v514, %v514
    %v520 = vpack.c.bf16 %v515, %v515
    %v521 = vpack.c.bf16 %v516, %v516
    %522 = vset.pattern.permute.xlu0 2
    %523 = vperm.xlu0 %522, %v60
    %v524 = vpop.permute.xlu0 %523
    %v527 = vsel %vm104, %v517, 0
    %v530 = vsel %vm108, %v518, 0
    %v533 = vsel %vm108, %v519, 0
    %v536 = vsel %vm108, %v520, 0
    %v539 = vsel %vm108, %v521, 0
    %541 = vmatprep.subr.bf16.mxu0 %v533
    %542 = vmatpush1.bf16.msra.mxu0 %v530
    %543 = vmatprep.subr.bf16.mxu0 0
    %544 = vmatpush1.bf16.msra.mxu0 0
    %545 = vmatprep.subr.bf16.mxu0 0
    %546 = vmatpush1.bf16.msra.mxu0 0
    %547 = vmatprep.subr.bf16.mxu0 0
    %548 = vmatpush1.bf16.msra.mxu0 0
    %549 = vmatprep.subr.bf16.mxu0 0
    %550 = vmatpush1.bf16.msra.mxu0 0
    %551 = vmatprep.subr.bf16.mxu0 0
    %552 = vmatpush1.bf16.msra.mxu0 0
    %553 = vmatprep.subr.bf16.mxu0 0
    %554 = vmatpush1.bf16.msra.mxu0 0
    %555 = vmatprep.subr.bf16.mxu0 0
    %556 = vmatpush1.bf16.msra.mxu0 0
    %557 = vmatprep.subr.bf16.mxu0 0
    %558 = vmatpush1.bf16.msra.mxu0 0
    %559 = vmatprep.subr.bf16.mxu0 0
    %560 = vmatpush1.bf16.msra.mxu0 0
    %561 = vmatprep.subr.bf16.mxu0 0
    %562 = vmatpush1.bf16.msra.mxu0 0
    %563 = vmatprep.subr.bf16.mxu0 0
    %564 = vmatpush1.bf16.msra.mxu0 0
    %565 = vmatprep.subr.bf16.mxu0 0
    %566 = vmatpush1.bf16.msra.mxu0 0
    %567 = vmatprep.subr.bf16.mxu0 0
    %568 = vmatpush1.bf16.msra.mxu0 0
    %569 = vmatprep.subr.bf16.mxu0 0
    %570 = vmatpush1.bf16.msra.mxu0 0
    %571 = vmatprep.subr.bf16.mxu0 0
    %572 = vmatpush1.bf16.msra.mxu0 0
    %573 = vmatprep.mubr.bf16.mxu0 0
    %574 = vmatmul.mubr.bf16.gmra.mrb[0].mxu0 %v527
    %v575 = vpop.f32.mrb[0].mxu0
    %v576 = vadd.f32 %v524, %v575
    %v577 = vpop.f32.mrb[0].mxu0
    %v578 = vadd.f32 %v524, %v577
    %v579 = vpop.f32.mrb[0].mxu0
    %v580 = vpop.f32.mrb[0].mxu0
    %581 = vdwg.mxu0
    %582 = vmatprep.subr.bf16.mxu0 %v539
    %583 = vmatpush1.bf16.msra.mxu0 %v536
    %584 = vmatprep.subr.bf16.mxu0 0
    %585 = vmatpush1.bf16.msra.mxu0 0
    %586 = vmatprep.subr.bf16.mxu0 0
    %587 = vmatpush1.bf16.msra.mxu0 0
    %588 = vmatprep.subr.bf16.mxu0 0
    %589 = vmatpush1.bf16.msra.mxu0 0
    %590 = vmatprep.subr.bf16.mxu0 0
    %591 = vmatpush1.bf16.msra.mxu0 0
    %592 = vmatprep.subr.bf16.mxu0 0
    %593 = vmatpush1.bf16.msra.mxu0 0
    %594 = vmatprep.subr.bf16.mxu0 0
    %595 = vmatpush1.bf16.msra.mxu0 0
    %596 = vmatprep.subr.bf16.mxu0 0
    %597 = vmatpush1.bf16.msra.mxu0 0
    %598 = vmatprep.subr.bf16.mxu0 0
    %599 = vmatpush1.bf16.msra.mxu0 0
    %600 = vmatprep.subr.bf16.mxu0 0
    %601 = vmatpush1.bf16.msra.mxu0 0
    %602 = vmatprep.subr.bf16.mxu0 0
    %603 = vmatpush1.bf16.msra.mxu0 0
    %604 = vmatprep.subr.bf16.mxu0 0
    %605 = vmatpush1.bf16.msra.mxu0 0
    %606 = vmatprep.subr.bf16.mxu0 0
    %607 = vmatpush1.bf16.msra.mxu0 0
    %608 = vmatprep.subr.bf16.mxu0 0
    %609 = vmatpush1.bf16.msra.mxu0 0
    %610 = vmatprep.subr.bf16.mxu0 0
    %611 = vmatpush1.bf16.msra.mxu0 0
    %612 = vmatprep.subr.bf16.mxu0 0
    %613 = vmatpush1.bf16.msra.mxu0 0
    %614 = vmatprep.mubr.bf16.mxu0 0
    %615 = vmatmul.mubr.bf16.gmra.mrb[0].mxu0 %v527
    %v616 = vpop.f32.mrb[0].mxu0
    %v617 = vadd.f32 %v524, %v616
    %v618 = vpop.f32.mrb[0].mxu0
    %v619 = vadd.f32 %v524, %v618
    %v620 = vpop.f32.mrb[0].mxu0
    %v621 = vpop.f32.mrb[0].mxu0
    %622 = vdwg.mxu0
    %623 = vset.pattern.permute.xlu0 3
    %624 = vperm.xlu0 %623, %v60
    %v625 = vpop.permute.xlu0 %624
    %v627 = vmul.f32 %v576, %v625
    %v628 = vmul.f32 %v578, %v625
    %v629 = vmul.f32 %v617, %v625
    %v630 = vmul.f32 %v619, %v625
    %v631 = vsel %vm361, %v627, 0.0
    %v632 = vrot.slane %v631, 4
    %v633 = vadd.f32 %v631, %v632
    %v634 = vrot.slane %v633, 2
    %v635 = vadd.f32 %v633, %v634
    %v636 = vrot.slane %v635, 1
    %v637 = vadd.f32 %v635, %v636
    %v638 = vsel %vm361, %v628, 0.0
    %v639 = vrot.slane %v638, 4
    %v640 = vadd.f32 %v638, %v639
    %v641 = vrot.slane %v640, 2
    %v642 = vadd.f32 %v640, %v641
    %v643 = vrot.slane %v642, 1
    %v644 = vadd.f32 %v642, %v643
    %v645 = vsel %vm361, %v629, 0.0
    %v646 = vrot.slane %v645, 4
    %v647 = vadd.f32 %v645, %v646
    %v648 = vrot.slane %v647, 2
    %v649 = vadd.f32 %v647, %v648
    %v650 = vrot.slane %v649, 1
    %v651 = vadd.f32 %v649, %v650
    %v652 = vsel %vm361, %v630, 0.0
    %v653 = vrot.slane %v652, 4
    %v654 = vadd.f32 %v652, %v653
    %v655 = vrot.slane %v654, 2
    %v656 = vadd.f32 %v654, %v655
    %v657 = vrot.slane %v656, 1
    %v658 = vadd.f32 %v656, %v657
    %v659 = vmax.f32 %v637, %v644
    %v660 = vmax.f32 %v651, %v658
    %v661 = vmax.f32 %v659, %v660
    %662 = vmax.xlane.f32.xlu0 %v661
    %v663 = vpop.xlane.xlu0 %662
    %v664 = vsub.f32 %v637, %v663
    %v665 = vsub.f32 %v644, %v663
    %v666 = vsub.f32 %v651, %v663
    %v667 = vsub.f32 %v658, %v663
    %v668 = vmul.f32 %v664, 1.442695
    %v669 = vpow.pop %v668
    %v670 = vmul.f32 %v665, 1.442695
    %v671 = vpow.pop %v670
    %v672 = vmul.f32 %v666, 1.442695
    %v673 = vpow.pop %v672
    %v674 = vmul.f32 %v667, 1.442695
    %v675 = vpow.pop %v674
    %v680 = vrot.slane %v82, 4
    %v681 = vrot.slane %v83, 4
    %v682 = vrot.slane %v84, 4
    %v683 = vrot.slane %v85, 4
    %688 = vmatprep.subr.mxu0 %v681
    %689 = vmatpush1.xpose.msra.mxu0 %v680
    %690 = vmatprep.subr.mxu0 0.0
    %691 = vmatpush1.xpose.msra.mxu0 0.0
    %692 = vmatprep.subr.mxu0 0.0
    %693 = vmatpush1.xpose.msra.mxu0 0.0
    %694 = vmatprep.subr.mxu0 0.0
    %695 = vmatpush1.xpose.msra.mxu0 0.0
    %696 = vmatprep.subr.mxu0 0.0
    %697 = vmatpush1.xpose.msra.mxu0 0.0
    %698 = vmatprep.subr.mxu0 0.0
    %699 = vmatpush1.xpose.msra.mxu0 0.0
    %700 = vmatprep.subr.mxu0 0.0
    %701 = vmatpush1.xpose.msra.mxu0 0.0
    %702 = vmatprep.subr.mxu0 0.0
    %703 = vmatpush1.xpose.msra.mxu0 0.0
    %704 = vmatprep.subr.mxu0 0.0
    %705 = vmatpush1.xpose.msra.mxu0 0.0
    %706 = vmatprep.subr.mxu0 0.0
    %707 = vmatpush1.xpose.msra.mxu0 0.0
    %708 = vmatprep.subr.mxu0 0.0
    %709 = vmatpush1.xpose.msra.mxu0 0.0
    %710 = vmatprep.subr.mxu0 0.0
    %711 = vmatpush1.xpose.msra.mxu0 0.0
    %712 = vmatprep.subr.mxu0 0.0
    %713 = vmatpush1.xpose.msra.mxu0 0.0
    %714 = vmatprep.subr.mxu0 0.0
    %715 = vmatpush1.xpose.msra.mxu0 0.0
    %716 = vmatprep.subr.mxu0 0.0
    %717 = vmatpush1.xpose.msra.mxu0 0.0
    %718 = vmatprep.subr.mxu0 0.0
    %719 = vmatpush1.xpose.msra.mxu0 0.0
    %720 = vmatprep.subr.mxu0 0.0
    %721 = vmatpush1.xpose.msra.mxu0 0.0
    %722 = vmatprep.subr.mxu0 0.0
    %723 = vmatpush1.xpose.msra.mxu0 0.0
    %724 = vmatprep.subr.mxu0 0.0
    %725 = vmatpush1.xpose.msra.mxu0 0.0
    %726 = vmatprep.subr.mxu0 0.0
    %727 = vmatpush1.xpose.msra.mxu0 0.0
    %728 = vmatprep.subr.mxu0 0.0
    %729 = vmatpush1.xpose.msra.mxu0 0.0
    %730 = vmatprep.subr.mxu0 0.0
    %731 = vmatpush1.xpose.msra.mxu0 0.0
    %732 = vmatprep.subr.mxu0 0.0
    %733 = vmatpush1.xpose.msra.mxu0 0.0
    %734 = vmatprep.subr.mxu0 0.0
    %735 = vmatpush1.xpose.msra.mxu0 0.0
    %736 = vmatprep.subr.mxu0 0.0
    %737 = vmatpush1.xpose.msra.mxu0 0.0
    %738 = vmatprep.subr.mxu0 0.0
    %739 = vmatpush1.xpose.msra.mxu0 0.0
    %740 = vmatprep.subr.mxu0 0.0
    %741 = vmatpush1.xpose.msra.mxu0 0.0
    %742 = vmatprep.subr.mxu0 0.0
    %743 = vmatpush1.xpose.msra.mxu0 0.0
    %744 = vmatprep.subr.mxu0 0.0
    %745 = vmatpush1.xpose.msra.mxu0 0.0
    %746 = vmatprep.subr.mxu0 0.0
    %747 = vmatpush1.xpose.msra.mxu0 0.0
    %748 = vmatprep.subr.mxu0 0.0
    %749 = vmatpush1.xpose.msra.mxu0 0.0
    %750 = vmatprep.subr.mxu0 0.0
    %751 = vmatpush1.xpose.msra.mxu0 0.0
    %752 = vmatprep.mubr.f32.mxu0 %v671
    %753 = vmatmul.mubr.f32.gmra.mrb[0].mxu0 %v669
    %v754 = vpop.f32.mrb[0].mxu0
    %v755 = vadd.f32 0.0, %v754
    %v756 = vpop.f32.mrb[0].mxu0
    %757 = vdwg.mxu0
    %758 = vmatprep.subr.mxu0 %v683
    %759 = vmatpush1.xpose.msra.mxu0 %v682
    %760 = vmatprep.subr.mxu0 0.0
    %761 = vmatpush1.xpose.msra.mxu0 0.0
    %762 = vmatprep.subr.mxu0 0.0
    %763 = vmatpush1.xpose.msra.mxu0 0.0
    %764 = vmatprep.subr.mxu0 0.0
    %765 = vmatpush1.xpose.msra.mxu0 0.0
    %766 = vmatprep.subr.mxu0 0.0
    %767 = vmatpush1.xpose.msra.mxu0 0.0
    %768 = vmatprep.subr.mxu0 0.0
    %769 = vmatpush1.xpose.msra.mxu0 0.0
    %770 = vmatprep.subr.mxu0 0.0
    %771 = vmatpush1.xpose.msra.mxu0 0.0
    %772 = vmatprep.subr.mxu0 0.0
    %773 = vmatpush1.xpose.msra.mxu0 0.0
    %774 = vmatprep.subr.mxu0 0.0
    %775 = vmatpush1.xpose.msra.mxu0 0.0
    %776 = vmatprep.subr.mxu0 0.0
    %777 = vmatpush1.xpose.msra.mxu0 0.0
    %778 = vmatprep.subr.mxu0 0.0
    %779 = vmatpush1.xpose.msra.mxu0 0.0
    %780 = vmatprep.subr.mxu0 0.0
    %781 = vmatpush1.xpose.msra.mxu0 0.0
    %782 = vmatprep.subr.mxu0 0.0
    %783 = vmatpush1.xpose.msra.mxu0 0.0
    %784 = vmatprep.subr.mxu0 0.0
    %785 = vmatpush1.xpose.msra.mxu0 0.0
    %786 = vmatprep.subr.mxu0 0.0
    %787 = vmatpush1.xpose.msra.mxu0 0.0
    %788 = vmatprep.subr.mxu0 0.0
    %789 = vmatpush1.xpose.msra.mxu0 0.0
    %790 = vmatprep.subr.mxu0 0.0
    %791 = vmatpush1.xpose.msra.mxu0 0.0
    %792 = vmatprep.subr.mxu0 0.0
    %793 = vmatpush1.xpose.msra.mxu0 0.0
    %794 = vmatprep.subr.mxu0 0.0
    %795 = vmatpush1.xpose.msra.mxu0 0.0
    %796 = vmatprep.subr.mxu0 0.0
    %797 = vmatpush1.xpose.msra.mxu0 0.0
    %798 = vmatprep.subr.mxu0 0.0
    %799 = vmatpush1.xpose.msra.mxu0 0.0
    %800 = vmatprep.subr.mxu0 0.0
    %801 = vmatpush1.xpose.msra.mxu0 0.0
    %802 = vmatprep.subr.mxu0 0.0
    %803 = vmatpush1.xpose.msra.mxu0 0.0
    %804 = vmatprep.subr.mxu0 0.0
    %805 = vmatpush1.xpose.msra.mxu0 0.0
    %806 = vmatprep.subr.mxu0 0.0
    %807 = vmatpush1.xpose.msra.mxu0 0.0
    %808 = vmatprep.subr.mxu0 0.0
    %809 = vmatpush1.xpose.msra.mxu0 0.0
    %810 = vmatprep.subr.mxu0 0.0
    %811 = vmatpush1.xpose.msra.mxu0 0.0
    %812 = vmatprep.subr.mxu0 0.0
    %813 = vmatpush1.xpose.msra.mxu0 0.0
    %814 = vmatprep.subr.mxu0 0.0
    %815 = vmatpush1.xpose.msra.mxu0 0.0
    %816 = vmatprep.subr.mxu0 0.0
    %817 = vmatpush1.xpose.msra.mxu0 0.0
    %818 = vmatprep.subr.mxu0 0.0
    %819 = vmatpush1.xpose.msra.mxu0 0.0
    %820 = vmatprep.subr.mxu0 0.0
    %821 = vmatpush1.xpose.msra.mxu0 0.0
    %822 = vmatprep.mubr.f32.mxu0 %v675
    %823 = vmatmul.mubr.f32.gmra.mrb[0].mxu0 %v673
    %v824 = vpop.f32.mrb[0].mxu0
    %v825 = vadd.f32 %v755, %v824
    %v826 = vpop.f32.mrb[0].mxu0
    %827 = vdwg.mxu0
    %v828 = vmul.f32 %v576, %v669
    %v829 = vmul.f32 %v578, %v671
    %v830 = vmul.f32 %v617, %v673
    %v831 = vmul.f32 %v619, %v675
    %832 = vmatprep.subr.mxu0 %v681
    %833 = vmatpush1.xpose.msra.mxu0 %v680
    %834 = vmatprep.subr.mxu0 0.0
    %835 = vmatpush1.xpose.msra.mxu0 0.0
    %836 = vmatprep.subr.mxu0 0.0
    %837 = vmatpush1.xpose.msra.mxu0 0.0
    %838 = vmatprep.subr.mxu0 0.0
    %839 = vmatpush1.xpose.msra.mxu0 0.0
    %840 = vmatprep.subr.mxu0 0.0
    %841 = vmatpush1.xpose.msra.mxu0 0.0
    %842 = vmatprep.subr.mxu0 0.0
    %843 = vmatpush1.xpose.msra.mxu0 0.0
    %844 = vmatprep.subr.mxu0 0.0
    %845 = vmatpush1.xpose.msra.mxu0 0.0
    %846 = vmatprep.subr.mxu0 0.0
    %847 = vmatpush1.xpose.msra.mxu0 0.0
    %848 = vmatprep.subr.mxu0 0.0
    %849 = vmatpush1.xpose.msra.mxu0 0.0
    %850 = vmatprep.subr.mxu0 0.0
    %851 = vmatpush1.xpose.msra.mxu0 0.0
    %852 = vmatprep.subr.mxu0 0.0
    %853 = vmatpush1.xpose.msra.mxu0 0.0
    %854 = vmatprep.subr.mxu0 0.0
    %855 = vmatpush1.xpose.msra.mxu0 0.0
    %856 = vmatprep.subr.mxu0 0.0
    %857 = vmatpush1.xpose.msra.mxu0 0.0
    %858 = vmatprep.subr.mxu0 0.0
    %859 = vmatpush1.xpose.msra.mxu0 0.0
    %860 = vmatprep.subr.mxu0 0.0
    %861 = vmatpush1.xpose.msra.mxu0 0.0
    %862 = vmatprep.subr.mxu0 0.0
    %863 = vmatpush1.xpose.msra.mxu0 0.0
    %864 = vmatprep.subr.mxu0 0.0
    %865 = vmatpush1.xpose.msra.mxu0 0.0
    %866 = vmatprep.subr.mxu0 0.0
    %867 = vmatpush1.xpose.msra.mxu0 0.0
    %868 = vmatprep.subr.mxu0 0.0
    %869 = vmatpush1.xpose.msra.mxu0 0.0
    %870 = vmatprep.subr.mxu0 0.0
    %871 = vmatpush1.xpose.msra.mxu0 0.0
    %872 = vmatprep.subr.mxu0 0.0
    %873 = vmatpush1.xpose.msra.mxu0 0.0
    %874 = vmatprep.subr.mxu0 0.0
    %875 = vmatpush1.xpose.msra.mxu0 0.0
    %876 = vmatprep.subr.mxu0 0.0
    %877 = vmatpush1.xpose.msra.mxu0 0.0
    %878 = vmatprep.subr.mxu0 0.0
    %879 = vmatpush1.xpose.msra.mxu0 0.0
    %880 = vmatprep.subr.mxu0 0.0
    %881 = vmatpush1.xpose.msra.mxu0 0.0
    %882 = vmatprep.subr.mxu0 0.0
    %883 = vmatpush1.xpose.msra.mxu0 0.0
    %884 = vmatprep.subr.mxu0 0.0
    %885 = vmatpush1.xpose.msra.mxu0 0.0
    %886 = vmatprep.subr.mxu0 0.0
    %887 = vmatpush1.xpose.msra.mxu0 0.0
    %888 = vmatprep.subr.mxu0 0.0
    %889 = vmatpush1.xpose.msra.mxu0 0.0
    %890 = vmatprep.subr.mxu0 0.0
    %891 = vmatpush1.xpose.msra.mxu0 0.0
    %892 = vmatprep.subr.mxu0 0.0
    %893 = vmatpush1.xpose.msra.mxu0 0.0
    %894 = vmatprep.subr.mxu0 0.0
    %895 = vmatpush1.xpose.msra.mxu0 0.0
    %896 = vmatprep.mubr.f32.mxu0 %v829
    %897 = vmatmul.mubr.f32.gmra.mrb[0].mxu0 %v828
    %v898 = vpop.f32.mrb[0].mxu0
    %v899 = vadd.f32 0.0, %v898
    %v900 = vpop.f32.mrb[0].mxu0
    %901 = vdwg.mxu0
    %902 = vmatprep.subr.mxu0 %v683
    %903 = vmatpush1.xpose.msra.mxu0 %v682
    %904 = vmatprep.subr.mxu0 0.0
    %905 = vmatpush1.xpose.msra.mxu0 0.0
    %906 = vmatprep.subr.mxu0 0.0
    %907 = vmatpush1.xpose.msra.mxu0 0.0
    %908 = vmatprep.subr.mxu0 0.0
    %909 = vmatpush1.xpose.msra.mxu0 0.0
    %910 = vmatprep.subr.mxu0 0.0
    %911 = vmatpush1.xpose.msra.mxu0 0.0
    %912 = vmatprep.subr.mxu0 0.0
    %913 = vmatpush1.xpose.msra.mxu0 0.0
    %914 = vmatprep.subr.mxu0 0.0
    %915 = vmatpush1.xpose.msra.mxu0 0.0
    %916 = vmatprep.subr.mxu0 0.0
    %917 = vmatpush1.xpose.msra.mxu0 0.0
    %918 = vmatprep.subr.mxu0 0.0
    %919 = vmatpush1.xpose.msra.mxu0 0.0
    %920 = vmatprep.subr.mxu0 0.0
    %921 = vmatpush1.xpose.msra.mxu0 0.0
    %922 = vmatprep.subr.mxu0 0.0
    %923 = vmatpush1.xpose.msra.mxu0 0.0
    %924 = vmatprep.subr.mxu0 0.0
    %925 = vmatpush1.xpose.msra.mxu0 0.0
    %926 = vmatprep.subr.mxu0 0.0
    %927 = vmatpush1.xpose.msra.mxu0 0.0
    %928 = vmatprep.subr.mxu0 0.0
    %929 = vmatpush1.xpose.msra.mxu0 0.0
    %930 = vmatprep.subr.mxu0 0.0
    %931 = vmatpush1.xpose.msra.mxu0 0.0
    %932 = vmatprep.subr.mxu0 0.0
    %933 = vmatpush1.xpose.msra.mxu0 0.0
    %934 = vmatprep.subr.mxu0 0.0
    %935 = vmatpush1.xpose.msra.mxu0 0.0
    %936 = vmatprep.subr.mxu0 0.0
    %937 = vmatpush1.xpose.msra.mxu0 0.0
    %938 = vmatprep.subr.mxu0 0.0
    %939 = vmatpush1.xpose.msra.mxu0 0.0
    %940 = vmatprep.subr.mxu0 0.0
    %941 = vmatpush1.xpose.msra.mxu0 0.0
    %942 = vmatprep.subr.mxu0 0.0
    %943 = vmatpush1.xpose.msra.mxu0 0.0
    %944 = vmatprep.subr.mxu0 0.0
    %945 = vmatpush1.xpose.msra.mxu0 0.0
    %946 = vmatprep.subr.mxu0 0.0
    %947 = vmatpush1.xpose.msra.mxu0 0.0
    %948 = vmatprep.subr.mxu0 0.0
    %949 = vmatpush1.xpose.msra.mxu0 0.0
    %950 = vmatprep.subr.mxu0 0.0
    %951 = vmatpush1.xpose.msra.mxu0 0.0
    %952 = vmatprep.subr.mxu0 0.0
    %953 = vmatpush1.xpose.msra.mxu0 0.0
    %954 = vmatprep.subr.mxu0 0.0
    %955 = vmatpush1.xpose.msra.mxu0 0.0
    %956 = vmatprep.subr.mxu0 0.0
    %957 = vmatpush1.xpose.msra.mxu0 0.0
    %958 = vmatprep.subr.mxu0 0.0
    %959 = vmatpush1.xpose.msra.mxu0 0.0
    %960 = vmatprep.subr.mxu0 0.0
    %961 = vmatpush1.xpose.msra.mxu0 0.0
    %962 = vmatprep.subr.mxu0 0.0
    %963 = vmatpush1.xpose.msra.mxu0 0.0
    %964 = vmatprep.subr.mxu0 0.0
    %965 = vmatpush1.xpose.msra.mxu0 0.0
    %966 = vmatprep.mubr.f32.mxu0 %v831
    %967 = vmatmul.mubr.f32.gmra.mrb[0].mxu0 %v830
    %v968 = vpop.f32.mrb[0].mxu0
    %v969 = vadd.f32 %v899, %v968
    %v970 = vpop.f32.mrb[0].mxu0
    %971 = vdwg.mxu0
    %v972 = vrcp.pop %v825
    %v973 = vlaneseq
    %v974 = vshrl.u32 %v973, 7
    %v975 = vsub.s32 0, %v974
    %v976 = vrot.slane %v972, %v975
    %v977 = vmul.f32 %v969, %v976
    %979 = vset.pattern.permute.xlu0 0
    %980 = vperm.xlu0 %979, %v61
    %v981 = vpop.permute.xlu0 %980
    %v984 = vsel %vm104, %v58, 0
    %v987 = vsel %vm361, %v977, 0
    %989 = vmatprep.subr.mxu0 0.0
    %990 = vmatpush1.msra.mxu0 %v987
    %991 = vmatprep.subr.mxu0 0.0
    %992 = vmatpush1.msra.mxu0 0.0
    %993 = vmatprep.subr.mxu0 0.0
    %994 = vmatpush1.msra.mxu0 0.0
    %995 = vmatprep.subr.mxu0 0.0
    %996 = vmatpush1.msra.mxu0 0.0
    %997 = vmatprep.subr.mxu0 0.0
    %998 = vmatpush1.msra.mxu0 0.0
    %999 = vmatprep.subr.mxu0 0.0
    %1000 = vmatpush1.msra.mxu0 0.0
    %1001 = vmatprep.subr.mxu0 0.0
    %1002 = vmatpush1.msra.mxu0 0.0
    %1003 = vmatprep.subr.mxu0 0.0
    %1004 = vmatpush1.msra.mxu0 0.0
    %1005 = vmatprep.subr.mxu0 0.0
    %1006 = vmatpush1.msra.mxu0 0.0
    %1007 = vmatprep.subr.mxu0 0.0
    %1008 = vmatpush1.msra.mxu0 0.0
    %1009 = vmatprep.subr.mxu0 0.0
    %1010 = vmatpush1.msra.mxu0 0.0
    %1011 = vmatprep.subr.mxu0 0.0
    %1012 = vmatpush1.msra.mxu0 0.0
    %1013 = vmatprep.subr.mxu0 0.0
    %1014 = vmatpush1.msra.mxu0 0.0
    %1015 = vmatprep.subr.mxu0 0.0
    %1016 = vmatpush1.msra.mxu0 0.0
    %1017 = vmatprep.subr.mxu0 0.0
    %1018 = vmatpush1.msra.mxu0 0.0
    %1019 = vmatprep.subr.mxu0 0.0
    %1020 = vmatpush1.msra.mxu0 0.0
    %1021 = vmatprep.subr.mxu0 0.0
    %1022 = vmatpush1.msra.mxu0 0.0
    %1023 = vmatprep.subr.mxu0 0.0
    %1024 = vmatpush1.msra.mxu0 0.0
    %1025 = vmatprep.subr.mxu0 0.0
    %1026 = vmatpush1.msra.mxu0 0.0
    %1027 = vmatprep.subr.mxu0 0.0
    %1028 = vmatpush1.msra.mxu0 0.0
    %1029 = vmatprep.subr.mxu0 0.0
    %1030 = vmatpush1.msra.mxu0 0.0
    %1031 = vmatprep.subr.mxu0 0.0
    %1032 = vmatpush1.msra.mxu0 0.0
    %1033 = vmatprep.subr.mxu0 0.0
    %1034 = vmatpush1.msra.mxu0 0.0
    %1035 = vmatprep.subr.mxu0 0.0
    %1036 = vmatpush1.msra.mxu0 0.0
    %1037 = vmatprep.subr.mxu0 0.0
    %1038 = vmatpush1.msra.mxu0 0.0
    %1039 = vmatprep.subr.mxu0 0.0
    %1040 = vmatpush1.msra.mxu0 0.0
    %1041 = vmatprep.subr.mxu0 0.0
    %1042 = vmatpush1.msra.mxu0 0.0
    %1043 = vmatprep.subr.mxu0 0.0
    %1044 = vmatpush1.msra.mxu0 0.0
    %1045 = vmatprep.subr.mxu0 0.0
    %1046 = vmatpush1.msra.mxu0 0.0
    %1047 = vmatprep.subr.mxu0 0.0
    %1048 = vmatpush1.msra.mxu0 0.0
    %1049 = vmatprep.subr.mxu0 0.0
    %1050 = vmatpush1.msra.mxu0 0.0
    %1051 = vmatprep.subr.mxu0 0.0
    %1052 = vmatpush1.msra.mxu0 0.0
    %1053 = vmatprep.mubr.f32.mxu0 0.0
    %1054 = vmatmul.mubr.f32.gmra.mrb[0].mxu0 %v984
    %v1055 = vpop.f32.mrb[0].mxu0
    %v1056 = vadd.f32 %v981, %v1055
    %v1057 = vpop.f32.mrb[0].mxu0
    %1058 = vdwg.mxu0
    %vm1059 = vcmask 15360
    %v1060 = vsel %vm1059, %v1056, 0.0
    %v1061 = vrot.slane %v1060, 4
    %v1062 = vadd.f32 %v1060, %v1061
    %v1063 = vrot.slane %v1062, 2
    %v1064 = vadd.f32 %v1062, %v1063
    %v1065 = vrot.slane %v1064, 1
    %v1066 = vadd.f32 %v1064, %v1065
    %v1067 = vrcp.pop 8.0
    %v1068 = vmul.f32 %v1066, %v1067
    %v1069 = vsub.f32 %v1056, %v1068
    %v1070 = vmul.f32 %v1069, %v1069
    %v1071 = vsel %vm1059, %v1070, 0.0
    %v1072 = vrot.slane %v1071, 4
    %v1073 = vadd.f32 %v1071, %v1072
    %v1074 = vrot.slane %v1073, 2
    %v1075 = vadd.f32 %v1073, %v1074
    %v1076 = vrot.slane %v1075, 1
    %v1077 = vadd.f32 %v1075, %v1076
    %v1078 = vmul.f32 %v1077, %v1067
    %v1079 = vadd.f32 %v1078, 1e-05
    %v1080 = vrsqrt.pop %v1079
    %v1081 = vmul.f32 %v1069, %v1080
    %1082 = vset.pattern.permute.xlu0 1
    %1083 = vperm.xlu0 %1082, %v61
    %v1084 = vpop.permute.xlu0 %1083
    %v1086 = vmul.f32 %v1081, %v1084
    %1087 = vset.pattern.permute.xlu0 2
    %1088 = vperm.xlu0 %1087, %v61
    %v1089 = vpop.permute.xlu0 %1088
    %v1091 = vadd.f32 %v1086, %v1089
    %v1092 = vmax.f32 %v1091, 0.0
    %1093 = vset.pattern.permute.xlu0 4
    %1094 = vperm.xlu0 %1093, %v60
    %v1095 = vpop.permute.xlu0 %1094
    %vm1097 = vcmask 64512
    %v1099 = vsel %vm1097, %v59, 0
    %1101 = vmatprep.subr.mxu0 0.0
    %1102 = vmatpush1.msra.mxu0 %v1092
    %1103 = vmatprep.subr.mxu0 0.0
    %1104 = vmatpush1.msra.mxu0 0.0
    %1105 = vmatprep.subr.mxu0 0.0
    %1106 = vmatpush1.msra.mxu0 0.0
    %1107 = vmatprep.subr.mxu0 0.0
    %1108 = vmatpush1.msra.mxu0 0.0
    %1109 = vmatprep.subr.mxu0 0.0
    %1110 = vmatpush1.msra.mxu0 0.0
    %1111 = vmatprep.subr.mxu0 0.0
    %1112 = vmatpush1.msra.mxu0 0.0
    %1113 = vmatprep.subr.mxu0 0.0
    %1114 = vmatpush1.msra.mxu0 0.0
    %1115 = vmatprep.subr.mxu0 0.0
    %1116 = vmatpush1.msra.mxu0 0.0
    %1117 = vmatprep.subr.mxu0 0.0
    %1118 = vmatpush1.msra.mxu0 0.0
    %1119 = vmatprep.subr.mxu0 0.0
    %1120 = vmatpush1.msra.mxu0 0.0
    %1121 = vmatprep.subr.mxu0 0.0
    %1122 = vmatpush1.msra.mxu0 0.0
    %1123 = vmatprep.subr.mxu0 0.0
    %1124 = vmatpush1.msra.mxu0 0.0
    %1125 = vmatprep.subr.mxu0 0.0
    %1126 = vmatpush1.msra.mxu0 0.0
    %1127 = vmatprep.subr.mxu0 0.0
    %1128 = vmatpush1.msra.mxu0 0.0
    %1129 = vmatprep.subr.mxu0 0.0
    %1130 = vmatpush1.msra.mxu0 0.0
    %1131 = vmatprep.subr.mxu0 0.0
    %1132 = vmatpush1.msra.mxu0 0.0
    %1133 = vmatprep.subr.mxu0 0.0
    %1134 = vmatpush1.msra.mxu0 0.0
    %1135 = vmatprep.subr.mxu0 0.0
    %1136 = vmatpush1.msra.mxu0 0.0
    %1137 = vmatprep.subr.mxu0 0.0
    %1138 = vmatpush1.msra.mxu0 0.0
    %1139 = vmatprep.subr.mxu0 0.0
    %1140 = vmatpush1.msra.mxu0 0.0
    %1141 = vmatprep.subr.mxu0 0.0
    %1142 = vmatpush1.msra.mxu0 0.0
    %1143 = vmatprep.subr.mxu0 0.0
    %1144 = vmatpush1.msra.mxu0 0.0
    %1145 = vmatprep.subr.mxu0 0.0
    %1146 = vmatpush1.msra.mxu0 0.0
    %1147 = vmatprep.subr.mxu0 0.0
    %1148 = vmatpush1.msra.mxu0 0.0
    %1149 = vmatprep.subr.mxu0 0.0
    %1150 = vmatpush1.msra.mxu0 0.0
    %1151 = vmatprep.subr.mxu0 0.0
    %1152 = vmatpush1.msra.mxu0 0.0
    %1153 = vmatprep.subr.mxu0 0.0
    %1154 = vmatpush1.msra.mxu0 0.0
    %1155 = vmatprep.subr.mxu0 0.0
    %1156 = vmatpush1.msra.mxu0 0.0
    %1157 = vmatprep.subr.mxu0 0.0
    %1158 = vmatpush1.msra.mxu0 0.0
    %1159 = vmatprep.subr.mxu0 0.0
    %1160 = vmatpush1.msra.mxu0 0.0
    %1161 = vmatprep.subr.mxu0 0.0
    %1162 = vmatpush1.msra.mxu0 0.0
    %1163 = vmatprep.subr.mxu0 0.0
    %1164 = vmatpush1.msra.mxu0 0.0
    %1165 = vmatprep.mubr.f32.mxu0 0.0
    %1166 = vmatmul.mubr.f32.gmra.mrb[0].mxu0 %v1099
    %v1167 = vpop.f32.mrb[0].mxu0
    %v1168 = vadd.f32 %v1095, %v1167
    %v1169 = vpop.f32.mrb[0].mxu0
    %1170 = vdwg.mxu0
    %v1172 = vsel %vm1059, %v1168, 0
    %v1174 = vsel %vm108, %v680, 0
    %v1176 = vsel %vm108, %v681, 0
    %v1178 = vsel %vm108, %v682, 0
    %v1180 = vsel %vm108, %v683, 0
    %1182 = vmatprep.subr.mxu0 %v1176
    %1183 = vmatpush1.msra.mxu0 %v1174
    %1184 = vmatprep.subr.mxu0 0.0
    %1185 = vmatpush1.msra.mxu0 0.0
    %1186 = vmatprep.subr.mxu0 0.0
    %1187 = vmatpush1.msra.mxu0 0.0
    %1188 = vmatprep.subr.mxu0 0.0
    %1189 = vmatpush1.msra.mxu0 0.0
    %1190 = vmatprep.subr.mxu0 0.0
    %1191 = vmatpush1.msra.mxu0 0.0
    %1192 = vmatprep.subr.mxu0 0.0
    %1193 = vmatpush1.msra.mxu0 0.0
    %1194 = vmatprep.subr.mxu0 0.0
    %1195 = vmatpush1.msra.mxu0 0.0
    %1196 = vmatprep.subr.mxu0 0.0
    %1197 = vmatpush1.msra.mxu0 0.0
    %1198 = vmatprep.subr.mxu0 0.0
    %1199 = vmatpush1.msra.mxu0 0.0
    %1200 = vmatprep.subr.mxu0 0.0
    %1201 = vmatpush1.msra.mxu0 0.0
    %1202 = vmatprep.subr.mxu0 0.0
    %1203 = vmatpush1.msra.mxu0 0.0
    %1204 = vmatprep.subr.mxu0 0.0
    %1205 = vmatpush1.msra.mxu0 0.0
    %1206 = vmatprep.subr.mxu0 0.0
    %1207 = vmatpush1.msra.mxu0 0.0
    %1208 = vmatprep.subr.mxu0 0.0
    %1209 = vmatpush1.msra.mxu0 0.0
    %1210 = vmatprep.subr.mxu0 0.0
    %1211 = vmatpush1.msra.mxu0 0.0
    %1212 = vmatprep.subr.mxu0 0.0
    %1213 = vmatpush1.msra.mxu0 0.0
    %1214 = vmatprep.subr.mxu0 0.0
    %1215 = vmatpush1.msra.mxu0 0.0
    %1216 = vmatprep.subr.mxu0 0.0
    %1217 = vmatpush1.msra.mxu0 0.0
    %1218 = vmatprep.subr.mxu0 0.0
    %1219 = vmatpush1.msra.mxu0 0.0
    %1220 = vmatprep.subr.mxu0 0.0
    %1221 = vmatpush1.msra.mxu0 0.0
    %1222 = vmatprep.subr.mxu0 0.0
    %1223 = vmatpush1.msra.mxu0 0.0
    %1224 = vmatprep.subr.mxu0 0.0
    %1225 = vmatpush1.msra.mxu0 0.0
    %1226 = vmatprep.subr.mxu0 0.0
    %1227 = vmatpush1.msra.mxu0 0.0
    %1228 = vmatprep.subr.mxu0 0.0
    %1229 = vmatpush1.msra.mxu0 0.0
    %1230 = vmatprep.subr.mxu0 0.0
    %1231 = vmatpush1.msra.mxu0 0.0
    %1232 = vmatprep.subr.mxu0 0.0
    %1233 = vmatpush1.msra.mxu0 0.0
    %1234 = vmatprep.subr.mxu0 0.0
    %1235 = vmatpush1.msra.mxu0 0.0
    %1236 = vmatprep.subr.mxu0 0.0
    %1237 = vmatpush1.msra.mxu0 0.0
    %1238 = vmatprep.subr.mxu0 0.0
    %1239 = vmatpush1.msra.mxu0 0.0
    %1240 = vmatprep.subr.mxu0 0.0
    %1241 = vmatpush1.msra.mxu0 0.0
    %1242 = vmatprep.subr.mxu0 0.0
    %1243 = vmatpush1.msra.mxu0 0.0
    %1244 = vmatprep.subr.mxu0 0.0
    %1245 = vmatpush1.msra.mxu0 0.0
    %1246 = vmatprep.mubr.f32.mxu0 0.0
    %1247 = vmatmul.mubr.f32.gmra.mrb[0].mxu0 %v1172
    %v1248 = vpop.f32.mrb[0].mxu0
    %v1249 = vadd.f32 0.0, %v1248
    %v1250 = vpop.f32.mrb[0].mxu0
    %v1251 = vadd.f32 0.0, %v1250
    %1252 = vdwg.mxu0
    %1253 = vmatprep.subr.mxu0 %v1180
    %1254 = vmatpush1.msra.mxu0 %v1178
    %1255 = vmatprep.subr.mxu0 0.0
    %1256 = vmatpush1.msra.mxu0 0.0
    %1257 = vmatprep.subr.mxu0 0.0
    %1258 = vmatpush1.msra.mxu0 0.0
    %1259 = vmatprep.subr.mxu0 0.0
    %1260 = vmatpush1.msra.mxu0 0.0
    %1261 = vmatprep.subr.mxu0 0.0
    %1262 = vmatpush1.msra.mxu0 0.0
    %1263 = vmatprep.subr.mxu0 0.0
    %1264 = vmatpush1.msra.mxu0 0.0
    %1265 = vmatprep.subr.mxu0 0.0
    %1266 = vmatpush1.msra.mxu0 0.0
    %1267 = vmatprep.subr.mxu0 0.0
    %1268 = vmatpush1.msra.mxu0 0.0
    %1269 = vmatprep.subr.mxu0 0.0
    %1270 = vmatpush1.msra.mxu0 0.0
    %1271 = vmatprep.subr.mxu0 0.0
    %1272 = vmatpush1.msra.mxu0 0.0
    %1273 = vmatprep.subr.mxu0 0.0
    %1274 = vmatpush1.msra.mxu0 0.0
    %1275 = vmatprep.subr.mxu0 0.0
    %1276 = vmatpush1.msra.mxu0 0.0
    %1277 = vmatprep.subr.mxu0 0.0
    %1278 = vmatpush1.msra.mxu0 0.0
    %1279 = vmatprep.subr.mxu0 0.0
    %1280 = vmatpush1.msra.mxu0 0.0
    %1281 = vmatprep.subr.mxu0 0.0
    %1282 = vmatpush1.msra.mxu0 0.0
    %1283 = vmatprep.subr.mxu0 0.0
    %1284 = vmatpush1.msra.mxu0 0.0
    %1285 = vmatprep.subr.mxu0 0.0
    %1286 = vmatpush1.msra.mxu0 0.0
    %1287 = vmatprep.subr.mxu0 0.0
    %1288 = vmatpush1.msra.mxu0 0.0
    %1289 = vmatprep.subr.mxu0 0.0
    %1290 = vmatpush1.msra.mxu0 0.0
    %1291 = vmatprep.subr.mxu0 0.0
    %1292 = vmatpush1.msra.mxu0 0.0
    %1293 = vmatprep.subr.mxu0 0.0
    %1294 = vmatpush1.msra.mxu0 0.0
    %1295 = vmatprep.subr.mxu0 0.0
    %1296 = vmatpush1.msra.mxu0 0.0
    %1297 = vmatprep.subr.mxu0 0.0
    %1298 = vmatpush1.msra.mxu0 0.0
    %1299 = vmatprep.subr.mxu0 0.0
    %1300 = vmatpush1.msra.mxu0 0.0
    %1301 = vmatprep.subr.mxu0 0.0
    %1302 = vmatpush1.msra.mxu0 0.0
    %1303 = vmatprep.subr.mxu0 0.0
    %1304 = vmatpush1.msra.mxu0 0.0
    %1305 = vmatprep.subr.mxu0 0.0
    %1306 = vmatpush1.msra.mxu0 0.0
    %1307 = vmatprep.subr.mxu0 0.0
    %1308 = vmatpush1.msra.mxu0 0.0
    %1309 = vmatprep.subr.mxu0 0.0
    %1310 = vmatpush1.msra.mxu0 0.0
    %1311 = vmatprep.subr.mxu0 0.0
    %1312 = vmatpush1.msra.mxu0 0.0
    %1313 = vmatprep.subr.mxu0 0.0
    %1314 = vmatpush1.msra.mxu0 0.0
    %1315 = vmatprep.subr.mxu0 0.0
    %1316 = vmatpush1.msra.mxu0 0.0
    %1317 = vmatprep.mubr.f32.mxu0 0.0
    %1318 = vmatmul.mubr.f32.gmra.mrb[0].mxu0 %v1172
    %v1319 = vpop.f32.mrb[0].mxu0
    %v1320 = vadd.f32 0.0, %v1319
    %v1321 = vpop.f32.mrb[0].mxu0
    %v1322 = vadd.f32 0.0, %v1321
    %1323 = vdwg.mxu0
    %v1324 = vadd.f32 %v576, %v1249
    %v1325 = vadd.f32 %v578, %v1251
    %v1326 = vadd.f32 %v617, %v1320
    %v1327 = vadd.f32 %v619, %v1322
    %v1328 = vadd.f32 %v1324, %v86
    %v1329 = vadd.f32 %v1325, %v91
    %v1330 = vadd.f32 %v1326, %v87
    %v1331 = vadd.f32 %v1327, %v92
    %v1332 = vmax.f32 %v1328, 0.0
    %v1333 = vmax.f32 %v1329, 0.0
    %v1334 = vmax.f32 %v1330, 0.0
    %v1335 = vmax.f32 %v1331, 0.0
    %v1340 = vcombine.low %v1332, %v1333
    %v1341 = vcombine.low %v1334, %v1335
    %1344 = vst [vmem:[#allocation8] sm:$0xff] %v1340
    %1345 = vst [vmem:[#allocation8 + $0x8] sm:$0xff] %v1341
    // Predicated region
    $region26: #{tpu_custom_call.1} parent=1 // pred_check
      _
    $region27: #{tpu_custom_call.1} parent=1 // pred_check_branch
      %1347 = sbr.rel (0) target = $region29
    $region28: #{tpu_custom_call.1} parent=1 // pred_region
      %s1349 = ssub.s32 256, 256
      %1350 = vsyncadd [#allocation4], %s1349
      %s1352 = sshll.u32 [#allocation8], 4
      %s1353 = int_to_ptr.vmem [resolvable:$true] %s1352
      %1355 = dma.vmem_to_hbm [thread:$0]  %s1353, 256, %s3, [#allocation4]
    $region29: #{tpu_custom_call.1} parent=1 // pred_fallthru
      _
    // Predicated region
    $region30: #{tpu_custom_call.1} parent=1 // pred_check
      _
    $region31: #{tpu_custom_call.1} parent=1 // pred_check_branch
      %1357 = sbr.rel (0) target = $region33
    $region32: #{tpu_custom_call.1} parent=1 // pred_region
      %1358 = dma.done [#allocation4], 256
    $region33: #{tpu_custom_call.1} parent=1 // pred_fallthru
      _
    %1359 = vsyncpa [#allocation3], 1
    %1360 = vsyncpa [#allocation6], 1
    %1361 = vsyncpa [#allocation4], 1

</llo_original>
